<compile_context>
chip_gen: v7x
topology: tpu7x:2x2x1
jax: 0.10.0
libtpu: 0.0.40
codegen_flags: <defaults>
</compile_context>

<pallas_src>
import functools

import jax
import jax.numpy as jnp
import numpy as np
from jax import lax
from jax.experimental import pallas as pl
from jax.experimental.pallas import tpu as pltpu

LN_EPS = 1e-5
LANE = 128


def _round_up(v, m):
    return ((v + m - 1) // m) * m


def _relu(v):
    return jnp.maximum(v, 0.0)


def _sigmoid(v):
    return 1.0 / (1.0 + jnp.exp(-v))


def _layernorm(h, gamma, beta, true_dim):
    """LayerNorm over the last (lane) dim of a zero-padded activation.

    Sums run over the padded width, but padding lanes are exactly zero, so
    dividing by the true width reproduces the unpadded statistics. One-pass
    variance (E[h^2] - mu^2) saves one cross-lane reduction per LayerNorm."""
    inv = jnp.float32(1.0 / float(true_dim))
    mu = jnp.sum(h, axis=-1, keepdims=True) * inv
    ms = jnp.sum(h * h, axis=-1, keepdims=True) * inv
    var = ms - mu * mu
    return (h - mu) * lax.rsqrt(var + LN_EPS) * gamma + beta


# --------------------------------------------------------------------------
# Shared FFNN body (segnet and beamnet): operates on an already-loaded
# (TB, IN_P) activation, returns the (TB, OUT_P) pre-activation output.
# --------------------------------------------------------------------------
def _ffnn_body(x, depth, hidden_true,
               w0_ref, b0_ref, g0_ref, be0_ref,
               w1s_ref, b1s_ref, g1s_ref, be1s_ref,
               w2s_ref, b2s_ref, g2s_ref, be2s_ref,
               wf_ref, bf_ref):
    # stem: Linear -> Dropout(no-op) -> ReLU -> LayerNorm
    h = jnp.dot(x.astype(jnp.bfloat16), w0_ref[...],
                preferred_element_type=jnp.float32) + b0_ref[...]
    h = _layernorm(_relu(h), g0_ref[...], be0_ref[...], hidden_true)

    def block(d, h):
        identity = h
        o = jnp.dot(h.astype(jnp.bfloat16), w1s_ref[d],
                    preferred_element_type=jnp.float32) + b1s_ref[d]
        o = _relu(_layernorm(o, g1s_ref[d], be1s_ref[d], hidden_true))
        o = jnp.dot(o.astype(jnp.bfloat16), w2s_ref[d],
                    preferred_element_type=jnp.float32) + b2s_ref[d]
        o = _relu(_layernorm(o, g2s_ref[d], be2s_ref[d], hidden_true))
        return _relu(o + identity)

    h = lax.fori_loop(0, depth, block, h, unroll=True)

    return jnp.dot(h.astype(jnp.bfloat16), wf_ref[...],
                   preferred_element_type=jnp.float32) + bf_ref[...]


def _param_args(pp):
    return (pp["w0"], pp["b0"], pp["g0"], pp["be0"],
            pp["w1s"], pp["b1s"], pp["g1s"], pp["be1s"],
            pp["w2s"], pp["b2s"], pp["g2s"], pp["be2s"],
            pp["wf"], pp["bf"])


def _param_specs(depth, in_p, h_p, out_p):
    const2 = lambda i: (0, 0)
    const3 = lambda i: (0, 0, 0)
    return [
        pl.BlockSpec((in_p, h_p), const2),          # w0   (VMEM-resident params)
        pl.BlockSpec((1, h_p), const2),             # b0
        pl.BlockSpec((1, h_p), const2),             # g0
        pl.BlockSpec((1, h_p), const2),             # be0
        pl.BlockSpec((depth, h_p, h_p), const3),    # w1s
        pl.BlockSpec((depth, 1, h_p), const3),      # b1s
        pl.BlockSpec((depth, 1, h_p), const3),      # g1s
        pl.BlockSpec((depth, 1, h_p), const3),      # be1s
        pl.BlockSpec((depth, h_p, h_p), const3),    # w2s
        pl.BlockSpec((depth, 1, h_p), const3),      # b2s
        pl.BlockSpec((depth, 1, h_p), const3),      # g2s
        pl.BlockSpec((depth, 1, h_p), const3),      # be2s
        pl.BlockSpec((h_p, out_p), const2),         # wf
        pl.BlockSpec((1, out_p), const2),           # bf
    ]


def _vmem_limit_bytes(param_args, tile_bytes):
    # Resident params (double-buffered by the pipeline) + activation tiles + headroom.
    param_bytes = sum(int(np.prod(a.shape)) * a.dtype.itemsize for a in param_args)
    return int(min(100 * 2**20, max(32 * 2**20, 2 * param_bytes + 4 * tile_bytes)))


# --------------------------------------------------------------------------
# segnet kernel: per-sample FFNN with fused sigmoid on the output store.
# --------------------------------------------------------------------------
def segnet_kernel(depth, hidden_true,
                  x_ref,
                  w0_ref, b0_ref, g0_ref, be0_ref,
                  w1s_ref, b1s_ref, g1s_ref, be1s_ref,
                  w2s_ref, b2s_ref, g2s_ref, be2s_ref,
                  wf_ref, bf_ref,
                  seg_ref):
    y = _ffnn_body(x_ref[...], depth, hidden_true,
                   w0_ref, b0_ref, g0_ref, be0_ref,
                   w1s_ref, b1s_ref, g1s_ref, be1s_ref,
                   w2s_ref, b2s_ref, g2s_ref, be2s_ref,
                   wf_ref, bf_ref)
    seg_ref[...] = _sigmoid(y).astype(seg_ref.dtype)   # lane-dense (TB, OUT_P) store


def segnet_forward(x, pp, *, batch_tile=512):
    """Apply segnet-FFNN + sigmoid to a (batch, in_true) input using padded params."""
    batch, in_true = x.shape
    assert in_true == pp["in_true"]
    depth = pp["depth"]
    in_p, h_p, out_p = pp["in_p"], pp["h_p"], pp["out_p"]

    # bf16 activation tile (cast to bf16 for the MXU anyway) -> 2x less HBM read.
    tb = _round_up(min(batch_tile, _round_up(batch, 16)), 16)
    b_p = _round_up(batch, tb)
    xp = jnp.zeros((b_p, in_p), jnp.bfloat16).at[:batch, :in_true].set(
        x.astype(jnp.bfloat16))

    params = _param_args(pp)
    in_specs = ([pl.BlockSpec((tb, in_p), lambda i: (i, 0))]
                + _param_specs(depth, in_p, h_p, out_p))
    tile_bytes = tb * (in_p * 2 + (out_p + 4 * h_p) * 4)

    out = pl.pallas_call(
        functools.partial(segnet_kernel, depth, pp["hidden_true"]),
        out_shape=jax.ShapeDtypeStruct((b_p, out_p), jnp.float32),
        grid=(b_p // tb,),
        in_specs=in_specs,
        out_specs=pl.BlockSpec((tb, out_p), lambda i: (i, 0)),
        compiler_params=pltpu.CompilerParams(
            dimension_semantics=("parallel",),
            vmem_limit_bytes=_vmem_limit_bytes(params, tile_bytes)),
    )(xp, *params)
    return out[:batch, : pp["out_true"]]


# --------------------------------------------------------------------------
# beamnet kernel: gt-masked weighted average fused into the FFNN prologue.
# Outputs pred_theta and the (lane-padded) weighted_input.
# --------------------------------------------------------------------------
def beamnet_kernel(depth, hidden_true, c_true,
                   x_ref, m_ref,
                   w0_ref, b0_ref, g0_ref, be0_ref,
                   w1s_ref, b1s_ref, g1s_ref, be1s_ref,
                   w2s_ref, b2s_ref, g2s_ref, be2s_ref,
                   wf_ref, bf_ref,
                   theta_ref, wi_ref):
    xv = x_ref[...].astype(jnp.float32)            # (TB, C, S)
    m = m_ref[...].astype(jnp.float32)             # (TB, 1, S)   gt seg mask
    num = jnp.sum(xv * m, axis=2)                  # (TB, C)
    den = jnp.sum(m, axis=2) + 0.001               # (TB, 1)
    wi = num / den                                  # (TB, C) f32 (matches reference)

    # Build the 128-lane-padded weighted_input in the output buffer, then reuse
    # it as the FFNN stem activation (padded lanes are exactly zero, and the
    # padded rows of w0 are zero, so the K=IN_P matmul equals the true-K one).
    wi_ref[...] = jnp.zeros_like(wi_ref)           # lane-dense full store
    wi_ref[:, 0:c_true] = wi                       # masked store of the true channels
    wi_full = wi_ref[...]                          # (TB, IN_P)

    y = _ffnn_body(wi_full, depth, hidden_true,
                   w0_ref, b0_ref, g0_ref, be0_ref,
                   w1s_ref, b1s_ref, g1s_ref, be1s_ref,
                   w2s_ref, b2s_ref, g2s_ref, be2s_ref,
                   wf_ref, bf_ref)
    theta_ref[...] = y.astype(theta_ref.dtype)     # lane-dense (TB, OUT_P) store


def beamnet_fused_forward(x, gt_seg_mask, pp, *, batch_tile=256):
    b, c, s = x.shape
    assert c == pp["in_true"]
    depth = pp["depth"]
    in_p, h_p, out_p = pp["in_p"], pp["h_p"], pp["out_p"]

    tb = _round_up(min(batch_tile, _round_up(b, 8)), 8)
    b_p = _round_up(b, tb)
    xp = jnp.zeros((b_p, c, s), jnp.float32).at[:b].set(x.astype(jnp.float32))
    gp = jnp.zeros((b_p, 1, s), jnp.float32).at[:b].set(
        gt_seg_mask.astype(jnp.float32))

    params = _param_args(pp)
    in_specs = ([pl.BlockSpec((tb, c, s), lambda i: (i, 0, 0)),
                 pl.BlockSpec((tb, 1, s), lambda i: (i, 0, 0))]
                + _param_specs(depth, in_p, h_p, out_p))
    tile_bytes = tb * ((c + 1) * s + in_p + out_p + 4 * h_p) * 4

    theta, wi = pl.pallas_call(
        functools.partial(beamnet_kernel, depth, pp["hidden_true"], c),
        out_shape=(jax.ShapeDtypeStruct((b_p, out_p), jnp.float32),
                   jax.ShapeDtypeStruct((b_p, in_p), jnp.float32)),
        grid=(b_p // tb,),
        in_specs=in_specs,
        out_specs=(pl.BlockSpec((tb, out_p), lambda i: (i, 0)),
                   pl.BlockSpec((tb, in_p), lambda i: (i, 0))),
        compiler_params=pltpu.CompilerParams(
            dimension_semantics=("parallel",),
            vmem_limit_bytes=_vmem_limit_bytes(params, tile_bytes)),
    )(xp, gp, *params)
    return theta[:b, : pp["out_true"]], wi[:b, :c]


# --------------------------------------------------------------------------
# Full BeamNSegNet forward (eval mode, independent=True, average_before=True)
# --------------------------------------------------------------------------
def beamnsegnet_forward(x, gt_seg_mask, seg_pp, beam_pp):
    b, c, s = x.shape
    # segnet applied per session sample: (B, C, S) -> (B*S, C); sigmoid fused.
    seg_in = jnp.transpose(x, (0, 2, 1)).reshape(b * s, c)
    segmentation = segnet_forward(seg_in, seg_pp)                            # (B*S, 1)
    segmentation = jnp.transpose(segmentation.reshape(b, s, 1), (0, 2, 1))   # (B, 1, S)

    # independent=True -> weighted average uses the ground-truth mask; the
    # predicted (sigmoid) mask is returned for the segmentation loss.
    pred_theta, weighted_input = beamnet_fused_forward(x, gt_seg_mask, beam_pp)
    return {"pred_theta": pred_theta,
            "segmentation": segmentation,
            "weighted_input": weighted_input}


# --------------------------------------------------------------------------
# Parameter construction (deterministic, synthetic). Linear weights stored
# (in, out) so the kernel computes y = x @ W + b (same math as x @ W.T + b).
# --------------------------------------------------------------------------
def init_ffnn_params(key, inputs, hidden, outputs, depth):
    ks = jax.random.split(key, 4)

    def lin(k, fan_in, fan_out):
        scale = 1.0 / np.sqrt(fan_in)
        return jax.random.uniform(k, (fan_in, fan_out), jnp.float32, -scale, scale)

    return {
        "w0": lin(ks[0], inputs, hidden),
        "b0": jnp.full((1, hidden), 0.01, jnp.float32),
        "g0": jnp.ones((1, hidden), jnp.float32),
        "be0": jnp.zeros((1, hidden), jnp.float32),
        "w1s": jnp.stack([lin(jax.random.fold_in(ks[1], d), hidden, hidden)
                          for d in range(depth)]),
        "b1s": jnp.full((depth, 1, hidden), 0.02, jnp.float32),
        "g1s": jnp.ones((depth, 1, hidden), jnp.float32),
        "be1s": jnp.zeros((depth, 1, hidden), jnp.float32),
        "w2s": jnp.stack([lin(jax.random.fold_in(ks[2], d), hidden, hidden)
                          for d in range(depth)]),
        "b2s": jnp.full((depth, 1, hidden), -0.02, jnp.float32),
        "g2s": jnp.ones((depth, 1, hidden), jnp.float32),
        "be2s": jnp.zeros((depth, 1, hidden), jnp.float32),
        "wf": lin(ks[3], hidden, outputs),
        "bf": jnp.zeros((1, outputs), jnp.float32),
    }


def pad_ffnn_params(p, inputs, hidden, outputs, depth):
    """Zero-pad every feature dim to a multiple of 128 (lane-dense) and cast the
    matmul weights to bf16. Padded bias/gamma/beta lanes are zero so padding
    lanes stay exactly zero through every Linear/LayerNorm/ReLU/residual."""
    in_p, h_p, out_p = (_round_up(inputs, LANE), _round_up(hidden, LANE),
                        _round_up(outputs, LANE))

    def pad2(a, rows, cols, dtype):
        z = jnp.zeros((rows, cols), dtype)
        return z.at[: a.shape[0], : a.shape[1]].set(a.astype(dtype))

    def pad3(a, rows, cols, dtype):
        z = jnp.zeros((a.shape[0], rows, cols), dtype)
        return z.at[:, : a.shape[1], : a.shape[2]].set(a.astype(dtype))

    return {
        "depth": depth, "in_true": inputs, "hidden_true": hidden, "out_true": outputs,
        "in_p": in_p, "h_p": h_p, "out_p": out_p,
        "w0": pad2(p["w0"], in_p, h_p, jnp.bfloat16),
        "b0": pad2(p["b0"], 1, h_p, jnp.float32),
        "g0": pad2(p["g0"], 1, h_p, jnp.float32),
        "be0": pad2(p["be0"], 1, h_p, jnp.float32),
        "w1s": pad3(p["w1s"], h_p, h_p, jnp.bfloat16),
        "b1s": pad3(p["b1s"], 1, h_p, jnp.float32),
        "g1s": pad3(p["g1s"], 1, h_p, jnp.float32),
        "be1s": pad3(p["be1s"], 1, h_p, jnp.float32),
        "w2s": pad3(p["w2s"], h_p, h_p, jnp.bfloat16),
        "b2s": pad3(p["b2s"], 1, h_p, jnp.float32),
        "g2s": pad3(p["g2s"], 1, h_p, jnp.float32),
        "be2s": pad3(p["be2s"], 1, h_p, jnp.float32),
        "wf": pad2(p["wf"], h_p, out_p, jnp.bfloat16),
        "bf": pad2(p["bf"], 1, out_p, jnp.float32),
    }


# --------------------------------------------------------------------------
# Pure-JAX reference (mirrors the kernel math: bf16 matmul inputs, f32 acc,
# one-pass LayerNorm) for validation.
# --------------------------------------------------------------------------
def ffnn_reference(x, p, depth):
    def bdot(a, w):
        return jnp.dot(a.astype(jnp.bfloat16), w.astype(jnp.bfloat16),
                       preferred_element_type=jnp.float32)

    def ln(h, g, be):
        d = h.shape[-1]
        mu = jnp.sum(h, -1, keepdims=True) / d
        ms = jnp.sum(h * h, -1, keepdims=True) / d
        return (h - mu) * lax.rsqrt(ms - mu * mu + LN_EPS) * g + be

    h = ln(_relu(bdot(x, p["w0"]) + p["b0"]), p["g0"], p["be0"])
    for d in range(depth):
        identity = h
        o = _relu(ln(bdot(h, p["w1s"][d]) + p["b1s"][d], p["g1s"][d], p["be1s"][d]))
        o = _relu(ln(bdot(o, p["w2s"][d]) + p["b2s"][d], p["g2s"][d], p["be2s"][d]))
        h = _relu(o + identity)
    return bdot(h, p["wf"]) + p["bf"]


def beamnsegnet_reference(x, gt_seg_mask, seg_params, seg_depth, beam_params, beam_depth):
    b, c, s = x.shape
    seg_in = jnp.transpose(x, (0, 2, 1)).reshape(b * s, c)
    logits = jnp.transpose(ffnn_reference(seg_in, seg_params, seg_depth).reshape(b, s, 1),
                           (0, 2, 1))
    segmentation = _sigmoid(logits)
    seg_mask = gt_seg_mask.astype(jnp.float32)
    weighted_input = (x * seg_mask).sum(axis=2) / (seg_mask.sum(axis=2) + 0.001)
    pred_theta = ffnn_reference(weighted_input, beam_params, beam_depth)
    return {"pred_theta": pred_theta, "segmentation": segmentation,
            "weighted_input": weighted_input}


if __name__ == "__main__":
    B, C, S = 4, 4, 16                       # batch, input channels, session size
    SEG_HIDDEN, SEG_DEPTH, SEG_OUT = 32, 2, 1
    BEAM_HIDDEN, BEAM_DEPTH, BEAM_OUT = 32, 2, 8

    key = jax.random.PRNGKey(0)
    kx, km, ks, kb = jax.random.split(key, 4)
    x = jax.random.normal(kx, (B, C, S), jnp.float32)
    gt_seg_mask = (jax.random.uniform(km, (B, 1, S)) > 0.5).astype(jnp.float32)

    seg_params = init_ffnn_params(ks, C, SEG_HIDDEN, SEG_OUT, SEG_DEPTH)
    beam_params = init_ffnn_params(kb, C, BEAM_HIDDEN, BEAM_OUT, BEAM_DEPTH)
    seg_pp = pad_ffnn_params(seg_params, C, SEG_HIDDEN, SEG_OUT, SEG_DEPTH)
    beam_pp = pad_ffnn_params(beam_params, C, BEAM_HIDDEN, BEAM_OUT, BEAM_DEPTH)

    out = beamnsegnet_forward(x, gt_seg_mask, seg_pp, beam_pp)
    out = jax.block_until_ready(out)

    ref = jax.block_until_ready(
        beamnsegnet_reference(x, gt_seg_mask, seg_params, SEG_DEPTH,
                              beam_params, BEAM_DEPTH))

    # bf16 matmul inputs -> loosened tolerance.
    for name in ("pred_theta", "segmentation", "weighted_input"):
        np.testing.assert_allclose(np.asarray(out[name]), np.asarray(ref[name]),
                                   rtol=2e-2, atol=2e-2)

    print("KERNEL_OK")
</pallas_src>

<mosaic_0001>
module attributes {stable_mosaic.version = 11 : i64} {
  func.func @segnet_kernel(%arg0: i32, %arg1: memref<64x128xbf16, #tpu.memory_space<vmem>>, %arg2: memref<128x128xbf16, #tpu.memory_space<vmem>>, %arg3: memref<1x128xf32, #tpu.memory_space<vmem>>, %arg4: memref<1x128xf32, #tpu.memory_space<vmem>>, %arg5: memref<1x128xf32, #tpu.memory_space<vmem>>, %arg6: memref<2x128x128xbf16, #tpu.memory_space<vmem>>, %arg7: memref<2x1x128xf32, #tpu.memory_space<vmem>>, %arg8: memref<2x1x128xf32, #tpu.memory_space<vmem>>, %arg9: memref<2x1x128xf32, #tpu.memory_space<vmem>>, %arg10: memref<2x128x128xbf16, #tpu.memory_space<vmem>>, %arg11: memref<2x1x128xf32, #tpu.memory_space<vmem>>, %arg12: memref<2x1x128xf32, #tpu.memory_space<vmem>>, %arg13: memref<2x1x128xf32, #tpu.memory_space<vmem>>, %arg14: memref<128x128xbf16, #tpu.memory_space<vmem>>, %arg15: memref<1x128xf32, #tpu.memory_space<vmem>>, %arg16: memref<64x128xf32, #tpu.memory_space<vmem>>) attributes {dimension_semantics = [#tpu.dimension_semantics<parallel>], iteration_bounds = array<i64: 1>, scalar_prefetch = 0 : i64, scratch_operands = 0 : i64, tpu.core_type = #tpu.core_type<tc>, window_params = [{transform_indices = @transform_0, window_bounds = array<i64: 64, 128>}, {pipeline_mode = #tpu.pipeline_mode<synchronous>, transform_indices = @transform_1, window_bounds = array<i64: 128, 128>}, {pipeline_mode = #tpu.pipeline_mode<synchronous>, transform_indices = @transform_2, window_bounds = array<i64: 1, 128>}, {pipeline_mode = #tpu.pipeline_mode<synchronous>, transform_indices = @transform_3, window_bounds = array<i64: 1, 128>}, {pipeline_mode = #tpu.pipeline_mode<synchronous>, transform_indices = @transform_4, window_bounds = array<i64: 1, 128>}, {pipeline_mode = #tpu.pipeline_mode<synchronous>, transform_indices = @transform_5, window_bounds = array<i64: 2, 128, 128>}, {pipeline_mode = #tpu.pipeline_mode<synchronous>, transform_indices = @transform_6, window_bounds = array<i64: 2, 1, 128>}, {pipeline_mode = #tpu.pipeline_mode<synchronous>, transform_indices = @transform_7, window_bounds = array<i64: 2, 1, 128>}, {pipeline_mode = #tpu.pipeline_mode<synchronous>, transform_indices = @transform_8, window_bounds = array<i64: 2, 1, 128>}, {pipeline_mode = #tpu.pipeline_mode<synchronous>, transform_indices = @transform_9, window_bounds = array<i64: 2, 128, 128>}, {pipeline_mode = #tpu.pipeline_mode<synchronous>, transform_indices = @transform_10, window_bounds = array<i64: 2, 1, 128>}, {pipeline_mode = #tpu.pipeline_mode<synchronous>, transform_indices = @transform_11, window_bounds = array<i64: 2, 1, 128>}, {pipeline_mode = #tpu.pipeline_mode<synchronous>, transform_indices = @transform_12, window_bounds = array<i64: 2, 1, 128>}, {pipeline_mode = #tpu.pipeline_mode<synchronous>, transform_indices = @transform_13, window_bounds = array<i64: 128, 128>}, {pipeline_mode = #tpu.pipeline_mode<synchronous>, transform_indices = @transform_14, window_bounds = array<i64: 1, 128>}, {transform_indices = @transform_15, window_bounds = array<i64: 64, 128>}]} {
    %c0 = arith.constant 0 : index
    %c0_0 = arith.constant 0 : index
    %0 = vector.load %arg1[%c0, %c0_0] : memref<64x128xbf16, #tpu.memory_space<vmem>>, vector<64x128xbf16>
    %c0_1 = arith.constant 0 : index
    %c0_2 = arith.constant 0 : index
    %1 = vector.load %arg2[%c0_1, %c0_2] : memref<128x128xbf16, #tpu.memory_space<vmem>>, vector<128x128xbf16>
    %cst = arith.constant dense<0.000000e+00> : vector<64x128xf32>
    %2 = tpu.matmul %0, %1, %cst {dimension_numbers = #tpu.dot_dimension_numbers<[1], [0], [0], [1], [0, 0, 1, 1], [], []>} : vector<64x128xbf16>, vector<128x128xbf16>, vector<64x128xf32> -> vector<64x128xf32>
    %c0_3 = arith.constant 0 : index
    %c0_4 = arith.constant 0 : index
    %3 = vector.load %arg3[%c0_3, %c0_4] : memref<1x128xf32, #tpu.memory_space<vmem>>, vector<1x128xf32>
    %4 = vector.broadcast %3 : vector<1x128xf32> to vector<64x128xf32>
    %5 = arith.addf %2, %4 : vector<64x128xf32>
    %cst_5 = arith.constant 0.000000e+00 : f32
    %6 = vector.broadcast %cst_5 : f32 to vector<64x128xf32>
    %7 = arith.maximumf %5, %6 : vector<64x128xf32>
    %c0_6 = arith.constant 0 : index
    %c0_7 = arith.constant 0 : index
    %8 = vector.load %arg4[%c0_6, %c0_7] : memref<1x128xf32, #tpu.memory_space<vmem>>, vector<1x128xf32>
    %c0_8 = arith.constant 0 : index
    %c0_9 = arith.constant 0 : index
    %9 = vector.load %arg5[%c0_8, %c0_9] : memref<1x128xf32, #tpu.memory_space<vmem>>, vector<1x128xf32>
    %cst_10 = arith.constant dense<0.000000e+00> : vector<64xf32>
    %10 = vector.multi_reduction <add>, %7, %cst_10 [1] : vector<64x128xf32> to vector<64xf32>
    %11 = vector.shape_cast %10 : vector<64xf32> to vector<64x1xf32>
    %cst_11 = arith.constant 3.125000e-02 : f32
    %12 = vector.broadcast %cst_11 : f32 to vector<64x1xf32>
    %13 = arith.mulf %11, %12 : vector<64x1xf32>
    %14 = arith.mulf %7, %7 : vector<64x128xf32>
    %cst_12 = arith.constant dense<0.000000e+00> : vector<64xf32>
    %15 = vector.multi_reduction <add>, %14, %cst_12 [1] : vector<64x128xf32> to vector<64xf32>
    %16 = vector.shape_cast %15 : vector<64xf32> to vector<64x1xf32>
    %cst_13 = arith.constant 3.125000e-02 : f32
    %17 = vector.broadcast %cst_13 : f32 to vector<64x1xf32>
    %18 = arith.mulf %16, %17 : vector<64x1xf32>
    %19 = arith.mulf %13, %13 : vector<64x1xf32>
    %20 = arith.subf %18, %19 : vector<64x1xf32>
    %21 = vector.broadcast %13 : vector<64x1xf32> to vector<64x128xf32>
    %22 = arith.subf %7, %21 : vector<64x128xf32>
    %cst_14 = arith.constant 9.99999974E-6 : f32
    %23 = vector.broadcast %cst_14 : f32 to vector<64x1xf32>
    %24 = arith.addf %20, %23 : vector<64x1xf32>
    %25 = math.rsqrt %24 : vector<64x1xf32>
    %26 = vector.broadcast %25 : vector<64x1xf32> to vector<64x128xf32>
    %27 = arith.mulf %22, %26 : vector<64x128xf32>
    %28 = vector.broadcast %8 : vector<1x128xf32> to vector<64x128xf32>
    %29 = arith.mulf %27, %28 : vector<64x128xf32>
    %30 = vector.broadcast %9 : vector<1x128xf32> to vector<64x128xf32>
    %31 = arith.addf %29, %30 : vector<64x128xf32>
    %c0_i32 = arith.constant 0 : i32
    %32 = arith.truncf %31 : vector<64x128xf32> to vector<64x128xbf16>
    %33 = arith.index_cast %c0_i32 : i32 to index
    %c0_15 = arith.constant 0 : index
    %c0_16 = arith.constant 0 : index
    %34 = vector.load %arg6[%33, %c0_15, %c0_16] : memref<2x128x128xbf16, #tpu.memory_space<vmem>>, vector<1x128x128xbf16>
    %35 = vector.shape_cast %34 : vector<1x128x128xbf16> to vector<128x128xbf16>
    %cst_17 = arith.constant dense<0.000000e+00> : vector<64x128xf32>
    %36 = tpu.matmul %32, %35, %cst_17 {dimension_numbers = #tpu.dot_dimension_numbers<[1], [0], [0], [1], [0, 0, 1, 1], [], []>} : vector<64x128xbf16>, vector<128x128xbf16>, vector<64x128xf32> -> vector<64x128xf32>
    %37 = arith.index_cast %c0_i32 : i32 to index
    %c0_18 = arith.constant 0 : index
    %c0_19 = arith.constant 0 : index
    %38 = vector.load %arg7[%37, %c0_18, %c0_19] : memref<2x1x128xf32, #tpu.memory_space<vmem>>, vector<1x1x128xf32>
    %39 = vector.shape_cast %38 : vector<1x1x128xf32> to vector<1x128xf32>
    %40 = vector.broadcast %39 : vector<1x128xf32> to vector<64x128xf32>
    %41 = arith.addf %36, %40 : vector<64x128xf32>
    %42 = arith.index_cast %c0_i32 : i32 to index
    %c0_20 = arith.constant 0 : index
    %c0_21 = arith.constant 0 : index
    %43 = vector.load %arg8[%42, %c0_20, %c0_21] : memref<2x1x128xf32, #tpu.memory_space<vmem>>, vector<1x1x128xf32>
    %44 = vector.shape_cast %43 : vector<1x1x128xf32> to vector<1x128xf32>
    %45 = arith.index_cast %c0_i32 : i32 to index
    %c0_22 = arith.constant 0 : index
    %c0_23 = arith.constant 0 : index
    %46 = vector.load %arg9[%45, %c0_22, %c0_23] : memref<2x1x128xf32, #tpu.memory_space<vmem>>, vector<1x1x128xf32>
    %47 = vector.shape_cast %46 : vector<1x1x128xf32> to vector<1x128xf32>
    %cst_24 = arith.constant dense<0.000000e+00> : vector<64xf32>
    %48 = vector.multi_reduction <add>, %41, %cst_24 [1] : vector<64x128xf32> to vector<64xf32>
    %49 = vector.shape_cast %48 : vector<64xf32> to vector<64x1xf32>
    %cst_25 = arith.constant 3.125000e-02 : f32
    %50 = vector.broadcast %cst_25 : f32 to vector<64x1xf32>
    %51 = arith.mulf %49, %50 : vector<64x1xf32>
    %52 = arith.mulf %41, %41 : vector<64x128xf32>
    %cst_26 = arith.constant dense<0.000000e+00> : vector<64xf32>
    %53 = vector.multi_reduction <add>, %52, %cst_26 [1] : vector<64x128xf32> to vector<64xf32>
    %54 = vector.shape_cast %53 : vector<64xf32> to vector<64x1xf32>
    %cst_27 = arith.constant 3.125000e-02 : f32
    %55 = vector.broadcast %cst_27 : f32 to vector<64x1xf32>
    %56 = arith.mulf %54, %55 : vector<64x1xf32>
    %57 = arith.mulf %51, %51 : vector<64x1xf32>
    %58 = arith.subf %56, %57 : vector<64x1xf32>
    %59 = vector.broadcast %51 : vector<64x1xf32> to vector<64x128xf32>
    %60 = arith.subf %41, %59 : vector<64x128xf32>
    %cst_28 = arith.constant 9.99999974E-6 : f32
    %61 = vector.broadcast %cst_28 : f32 to vector<64x1xf32>
    %62 = arith.addf %58, %61 : vector<64x1xf32>
    %63 = math.rsqrt %62 : vector<64x1xf32>
    %64 = vector.broadcast %63 : vector<64x1xf32> to vector<64x128xf32>
    %65 = arith.mulf %60, %64 : vector<64x128xf32>
    %66 = vector.broadcast %44 : vector<1x128xf32> to vector<64x128xf32>
    %67 = arith.mulf %65, %66 : vector<64x128xf32>
    %68 = vector.broadcast %47 : vector<1x128xf32> to vector<64x128xf32>
    %69 = arith.addf %67, %68 : vector<64x128xf32>
    %cst_29 = arith.constant 0.000000e+00 : f32
    %70 = vector.broadcast %cst_29 : f32 to vector<64x128xf32>
    %71 = arith.maximumf %69, %70 : vector<64x128xf32>
    %72 = arith.truncf %71 : vector<64x128xf32> to vector<64x128xbf16>
    %73 = arith.index_cast %c0_i32 : i32 to index
    %c0_30 = arith.constant 0 : index
    %c0_31 = arith.constant 0 : index
    %74 = vector.load %arg10[%73, %c0_30, %c0_31] : memref<2x128x128xbf16, #tpu.memory_space<vmem>>, vector<1x128x128xbf16>
    %75 = vector.shape_cast %74 : vector<1x128x128xbf16> to vector<128x128xbf16>
    %cst_32 = arith.constant dense<0.000000e+00> : vector<64x128xf32>
    %76 = tpu.matmul %72, %75, %cst_32 {dimension_numbers = #tpu.dot_dimension_numbers<[1], [0], [0], [1], [0, 0, 1, 1], [], []>} : vector<64x128xbf16>, vector<128x128xbf16>, vector<64x128xf32> -> vector<64x128xf32>
    %77 = arith.index_cast %c0_i32 : i32 to index
    %c0_33 = arith.constant 0 : index
    %c0_34 = arith.constant 0 : index
    %78 = vector.load %arg11[%77, %c0_33, %c0_34] : memref<2x1x128xf32, #tpu.memory_space<vmem>>, vector<1x1x128xf32>
    %79 = vector.shape_cast %78 : vector<1x1x128xf32> to vector<1x128xf32>
    %80 = vector.broadcast %79 : vector<1x128xf32> to vector<64x128xf32>
    %81 = arith.addf %76, %80 : vector<64x128xf32>
    %82 = arith.index_cast %c0_i32 : i32 to index
    %c0_35 = arith.constant 0 : index
    %c0_36 = arith.constant 0 : index
    %83 = vector.load %arg12[%82, %c0_35, %c0_36] : memref<2x1x128xf32, #tpu.memory_space<vmem>>, vector<1x1x128xf32>
    %84 = vector.shape_cast %83 : vector<1x1x128xf32> to vector<1x128xf32>
    %85 = arith.index_cast %c0_i32 : i32 to index
    %c0_37 = arith.constant 0 : index
    %c0_38 = arith.constant 0 : index
    %86 = vector.load %arg13[%85, %c0_37, %c0_38] : memref<2x1x128xf32, #tpu.memory_space<vmem>>, vector<1x1x128xf32>
    %87 = vector.shape_cast %86 : vector<1x1x128xf32> to vector<1x128xf32>
    %cst_39 = arith.constant dense<0.000000e+00> : vector<64xf32>
    %88 = vector.multi_reduction <add>, %81, %cst_39 [1] : vector<64x128xf32> to vector<64xf32>
    %89 = vector.shape_cast %88 : vector<64xf32> to vector<64x1xf32>
    %cst_40 = arith.constant 3.125000e-02 : f32
    %90 = vector.broadcast %cst_40 : f32 to vector<64x1xf32>
    %91 = arith.mulf %89, %90 : vector<64x1xf32>
    %92 = arith.mulf %81, %81 : vector<64x128xf32>
    %cst_41 = arith.constant dense<0.000000e+00> : vector<64xf32>
    %93 = vector.multi_reduction <add>, %92, %cst_41 [1] : vector<64x128xf32> to vector<64xf32>
    %94 = vector.shape_cast %93 : vector<64xf32> to vector<64x1xf32>
    %cst_42 = arith.constant 3.125000e-02 : f32
    %95 = vector.broadcast %cst_42 : f32 to vector<64x1xf32>
    %96 = arith.mulf %94, %95 : vector<64x1xf32>
    %97 = arith.mulf %91, %91 : vector<64x1xf32>
    %98 = arith.subf %96, %97 : vector<64x1xf32>
    %99 = vector.broadcast %91 : vector<64x1xf32> to vector<64x128xf32>
    %100 = arith.subf %81, %99 : vector<64x128xf32>
    %cst_43 = arith.constant 9.99999974E-6 : f32
    %101 = vector.broadcast %cst_43 : f32 to vector<64x1xf32>
    %102 = arith.addf %98, %101 : vector<64x1xf32>
    %103 = math.rsqrt %102 : vector<64x1xf32>
    %104 = vector.broadcast %103 : vector<64x1xf32> to vector<64x128xf32>
    %105 = arith.mulf %100, %104 : vector<64x128xf32>
    %106 = vector.broadcast %84 : vector<1x128xf32> to vector<64x128xf32>
    %107 = arith.mulf %105, %106 : vector<64x128xf32>
    %108 = vector.broadcast %87 : vector<1x128xf32> to vector<64x128xf32>
    %109 = arith.addf %107, %108 : vector<64x128xf32>
    %cst_44 = arith.constant 0.000000e+00 : f32
    %110 = vector.broadcast %cst_44 : f32 to vector<64x128xf32>
    %111 = arith.maximumf %109, %110 : vector<64x128xf32>
    %112 = arith.addf %111, %31 : vector<64x128xf32>
    %cst_45 = arith.constant 0.000000e+00 : f32
    %113 = vector.broadcast %cst_45 : f32 to vector<64x128xf32>
    %114 = arith.maximumf %112, %113 : vector<64x128xf32>
    %c1_i32 = arith.constant 1 : i32
    %115 = arith.truncf %114 : vector<64x128xf32> to vector<64x128xbf16>
    %116 = arith.index_cast %c1_i32 : i32 to index
    %c0_46 = arith.constant 0 : index
    %c0_47 = arith.constant 0 : index
    %117 = vector.load %arg6[%116, %c0_46, %c0_47] : memref<2x128x128xbf16, #tpu.memory_space<vmem>>, vector<1x128x128xbf16>
    %118 = vector.shape_cast %117 : vector<1x128x128xbf16> to vector<128x128xbf16>
    %cst_48 = arith.constant dense<0.000000e+00> : vector<64x128xf32>
    %119 = tpu.matmul %115, %118, %cst_48 {dimension_numbers = #tpu.dot_dimension_numbers<[1], [0], [0], [1], [0, 0, 1, 1], [], []>} : vector<64x128xbf16>, vector<128x128xbf16>, vector<64x128xf32> -> vector<64x128xf32>
    %120 = arith.index_cast %c1_i32 : i32 to index
    %c0_49 = arith.constant 0 : index
    %c0_50 = arith.constant 0 : index
    %121 = vector.load %arg7[%120, %c0_49, %c0_50] : memref<2x1x128xf32, #tpu.memory_space<vmem>>, vector<1x1x128xf32>
    %122 = vector.shape_cast %121 : vector<1x1x128xf32> to vector<1x128xf32>
    %123 = vector.broadcast %122 : vector<1x128xf32> to vector<64x128xf32>
    %124 = arith.addf %119, %123 : vector<64x128xf32>
    %125 = arith.index_cast %c1_i32 : i32 to index
    %c0_51 = arith.constant 0 : index
    %c0_52 = arith.constant 0 : index
    %126 = vector.load %arg8[%125, %c0_51, %c0_52] : memref<2x1x128xf32, #tpu.memory_space<vmem>>, vector<1x1x128xf32>
    %127 = vector.shape_cast %126 : vector<1x1x128xf32> to vector<1x128xf32>
    %128 = arith.index_cast %c1_i32 : i32 to index
    %c0_53 = arith.constant 0 : index
    %c0_54 = arith.constant 0 : index
    %129 = vector.load %arg9[%128, %c0_53, %c0_54] : memref<2x1x128xf32, #tpu.memory_space<vmem>>, vector<1x1x128xf32>
    %130 = vector.shape_cast %129 : vector<1x1x128xf32> to vector<1x128xf32>
    %cst_55 = arith.constant dense<0.000000e+00> : vector<64xf32>
    %131 = vector.multi_reduction <add>, %124, %cst_55 [1] : vector<64x128xf32> to vector<64xf32>
    %132 = vector.shape_cast %131 : vector<64xf32> to vector<64x1xf32>
    %cst_56 = arith.constant 3.125000e-02 : f32
    %133 = vector.broadcast %cst_56 : f32 to vector<64x1xf32>
    %134 = arith.mulf %132, %133 : vector<64x1xf32>
    %135 = arith.mulf %124, %124 : vector<64x128xf32>
    %cst_57 = arith.constant dense<0.000000e+00> : vector<64xf32>
    %136 = vector.multi_reduction <add>, %135, %cst_57 [1] : vector<64x128xf32> to vector<64xf32>
    %137 = vector.shape_cast %136 : vector<64xf32> to vector<64x1xf32>
    %cst_58 = arith.constant 3.125000e-02 : f32
    %138 = vector.broadcast %cst_58 : f32 to vector<64x1xf32>
    %139 = arith.mulf %137, %138 : vector<64x1xf32>
    %140 = arith.mulf %134, %134 : vector<64x1xf32>
    %141 = arith.subf %139, %140 : vector<64x1xf32>
    %142 = vector.broadcast %134 : vector<64x1xf32> to vector<64x128xf32>
    %143 = arith.subf %124, %142 : vector<64x128xf32>
    %cst_59 = arith.constant 9.99999974E-6 : f32
    %144 = vector.broadcast %cst_59 : f32 to vector<64x1xf32>
    %145 = arith.addf %141, %144 : vector<64x1xf32>
    %146 = math.rsqrt %145 : vector<64x1xf32>
    %147 = vector.broadcast %146 : vector<64x1xf32> to vector<64x128xf32>
    %148 = arith.mulf %143, %147 : vector<64x128xf32>
    %149 = vector.broadcast %127 : vector<1x128xf32> to vector<64x128xf32>
    %150 = arith.mulf %148, %149 : vector<64x128xf32>
    %151 = vector.broadcast %130 : vector<1x128xf32> to vector<64x128xf32>
    %152 = arith.addf %150, %151 : vector<64x128xf32>
    %cst_60 = arith.constant 0.000000e+00 : f32
    %153 = vector.broadcast %cst_60 : f32 to vector<64x128xf32>
    %154 = arith.maximumf %152, %153 : vector<64x128xf32>
    %155 = arith.truncf %154 : vector<64x128xf32> to vector<64x128xbf16>
    %156 = arith.index_cast %c1_i32 : i32 to index
    %c0_61 = arith.constant 0 : index
    %c0_62 = arith.constant 0 : index
    %157 = vector.load %arg10[%156, %c0_61, %c0_62] : memref<2x128x128xbf16, #tpu.memory_space<vmem>>, vector<1x128x128xbf16>
    %158 = vector.shape_cast %157 : vector<1x128x128xbf16> to vector<128x128xbf16>
    %cst_63 = arith.constant dense<0.000000e+00> : vector<64x128xf32>
    %159 = tpu.matmul %155, %158, %cst_63 {dimension_numbers = #tpu.dot_dimension_numbers<[1], [0], [0], [1], [0, 0, 1, 1], [], []>} : vector<64x128xbf16>, vector<128x128xbf16>, vector<64x128xf32> -> vector<64x128xf32>
    %160 = arith.index_cast %c1_i32 : i32 to index
    %c0_64 = arith.constant 0 : index
    %c0_65 = arith.constant 0 : index
    %161 = vector.load %arg11[%160, %c0_64, %c0_65] : memref<2x1x128xf32, #tpu.memory_space<vmem>>, vector<1x1x128xf32>
    %162 = vector.shape_cast %161 : vector<1x1x128xf32> to vector<1x128xf32>
    %163 = vector.broadcast %162 : vector<1x128xf32> to vector<64x128xf32>
    %164 = arith.addf %159, %163 : vector<64x128xf32>
    %165 = arith.index_cast %c1_i32 : i32 to index
    %c0_66 = arith.constant 0 : index
    %c0_67 = arith.constant 0 : index
    %166 = vector.load %arg12[%165, %c0_66, %c0_67] : memref<2x1x128xf32, #tpu.memory_space<vmem>>, vector<1x1x128xf32>
    %167 = vector.shape_cast %166 : vector<1x1x128xf32> to vector<1x128xf32>
    %168 = arith.index_cast %c1_i32 : i32 to index
    %c0_68 = arith.constant 0 : index
    %c0_69 = arith.constant 0 : index
    %169 = vector.load %arg13[%168, %c0_68, %c0_69] : memref<2x1x128xf32, #tpu.memory_space<vmem>>, vector<1x1x128xf32>
    %170 = vector.shape_cast %169 : vector<1x1x128xf32> to vector<1x128xf32>
    %cst_70 = arith.constant dense<0.000000e+00> : vector<64xf32>
    %171 = vector.multi_reduction <add>, %164, %cst_70 [1] : vector<64x128xf32> to vector<64xf32>
    %172 = vector.shape_cast %171 : vector<64xf32> to vector<64x1xf32>
    %cst_71 = arith.constant 3.125000e-02 : f32
    %173 = vector.broadcast %cst_71 : f32 to vector<64x1xf32>
    %174 = arith.mulf %172, %173 : vector<64x1xf32>
    %175 = arith.mulf %164, %164 : vector<64x128xf32>
    %cst_72 = arith.constant dense<0.000000e+00> : vector<64xf32>
    %176 = vector.multi_reduction <add>, %175, %cst_72 [1] : vector<64x128xf32> to vector<64xf32>
    %177 = vector.shape_cast %176 : vector<64xf32> to vector<64x1xf32>
    %cst_73 = arith.constant 3.125000e-02 : f32
    %178 = vector.broadcast %cst_73 : f32 to vector<64x1xf32>
    %179 = arith.mulf %177, %178 : vector<64x1xf32>
    %180 = arith.mulf %174, %174 : vector<64x1xf32>
    %181 = arith.subf %179, %180 : vector<64x1xf32>
    %182 = vector.broadcast %174 : vector<64x1xf32> to vector<64x128xf32>
    %183 = arith.subf %164, %182 : vector<64x128xf32>
    %cst_74 = arith.constant 9.99999974E-6 : f32
    %184 = vector.broadcast %cst_74 : f32 to vector<64x1xf32>
    %185 = arith.addf %181, %184 : vector<64x1xf32>
    %186 = math.rsqrt %185 : vector<64x1xf32>
    %187 = vector.broadcast %186 : vector<64x1xf32> to vector<64x128xf32>
    %188 = arith.mulf %183, %187 : vector<64x128xf32>
    %189 = vector.broadcast %167 : vector<1x128xf32> to vector<64x128xf32>
    %190 = arith.mulf %188, %189 : vector<64x128xf32>
    %191 = vector.broadcast %170 : vector<1x128xf32> to vector<64x128xf32>
    %192 = arith.addf %190, %191 : vector<64x128xf32>
    %cst_75 = arith.constant 0.000000e+00 : f32
    %193 = vector.broadcast %cst_75 : f32 to vector<64x128xf32>
    %194 = arith.maximumf %192, %193 : vector<64x128xf32>
    %195 = arith.addf %194, %114 : vector<64x128xf32>
    %cst_76 = arith.constant 0.000000e+00 : f32
    %196 = vector.broadcast %cst_76 : f32 to vector<64x128xf32>
    %197 = arith.maximumf %195, %196 : vector<64x128xf32>
    %c2_i32 = arith.constant 2 : i32
    %198 = arith.truncf %197 : vector<64x128xf32> to vector<64x128xbf16>
    %c0_77 = arith.constant 0 : index
    %c0_78 = arith.constant 0 : index
    %199 = vector.load %arg14[%c0_77, %c0_78] : memref<128x128xbf16, #tpu.memory_space<vmem>>, vector<128x128xbf16>
    %cst_79 = arith.constant dense<0.000000e+00> : vector<64x128xf32>
    %200 = tpu.matmul %198, %199, %cst_79 {dimension_numbers = #tpu.dot_dimension_numbers<[1], [0], [0], [1], [0, 0, 1, 1], [], []>} : vector<64x128xbf16>, vector<128x128xbf16>, vector<64x128xf32> -> vector<64x128xf32>
    %c0_80 = arith.constant 0 : index
    %c0_81 = arith.constant 0 : index
    %201 = vector.load %arg15[%c0_80, %c0_81] : memref<1x128xf32, #tpu.memory_space<vmem>>, vector<1x128xf32>
    %202 = vector.broadcast %201 : vector<1x128xf32> to vector<64x128xf32>
    %203 = arith.addf %200, %202 : vector<64x128xf32>
    %cst_82 = arith.constant 0.000000e+00 : f32
    %204 = vector.broadcast %cst_82 : f32 to vector<64x128xf32>
    %205 = arith.subf %204, %203 : vector<64x128xf32>
    %206 = math.exp %205 : vector<64x128xf32>
    %cst_83 = arith.constant 1.000000e+00 : f32
    %207 = vector.broadcast %cst_83 : f32 to vector<64x128xf32>
    %208 = arith.addf %207, %206 : vector<64x128xf32>
    %cst_84 = arith.constant 1.000000e+00 : f32
    %209 = vector.broadcast %cst_84 : f32 to vector<64x128xf32>
    %210 = arith.divf %209, %208 : vector<64x128xf32>
    %c0_85 = arith.constant 0 : index
    %c0_86 = arith.constant 0 : index
    %211 = vector.load %arg16[%c0_85, %c0_86] : memref<64x128xf32, #tpu.memory_space<vmem>>, vector<64x128xf32>
    tpu.vector_store %arg16[%c0_85, %c0_86], %210 {strides = array<i32>} : memref<64x128xf32, #tpu.memory_space<vmem>>, vector<64x128xf32>,
    return
  }
  func.func @transform_0(%arg0: i32) -> (i32, i32) {
    %c0_i32 = arith.constant 0 : i32
    %c0_i32_0 = arith.constant 0 : i32
    return %arg0, %c0_i32 : i32, i32
  }
  func.func @transform_1(%arg0: i32) -> (i32, i32) {
    %c0_i32 = arith.constant 0 : i32
    %c0_i32_0 = arith.constant 0 : i32
    %c0_i32_1 = arith.constant 0 : i32
    return %c0_i32, %c0_i32_0 : i32, i32
  }
  func.func @transform_2(%arg0: i32) -> (i32, i32) {
    %c0_i32 = arith.constant 0 : i32
    %c0_i32_0 = arith.constant 0 : i32
    %c0_i32_1 = arith.constant 0 : i32
    return %c0_i32, %c0_i32_0 : i32, i32
  }
  func.func @transform_3(%arg0: i32) -> (i32, i32) {
    %c0_i32 = arith.constant 0 : i32
    %c0_i32_0 = arith.constant 0 : i32
    %c0_i32_1 = arith.constant 0 : i32
    return %c0_i32, %c0_i32_0 : i32, i32
  }
  func.func @transform_4(%arg0: i32) -> (i32, i32) {
    %c0_i32 = arith.constant 0 : i32
    %c0_i32_0 = arith.constant 0 : i32
    %c0_i32_1 = arith.constant 0 : i32
    return %c0_i32, %c0_i32_0 : i32, i32
  }
  func.func @transform_5(%arg0: i32) -> (i32, i32, i32) {
    %c0_i32 = arith.constant 0 : i32
    %c0_i32_0 = arith.constant 0 : i32
    %c0_i32_1 = arith.constant 0 : i32
    %c0_i32_2 = arith.constant 0 : i32
    return %c0_i32, %c0_i32_0, %c0_i32_1 : i32, i32, i32
  }
  func.func @transform_6(%arg0: i32) -> (i32, i32, i32) {
    %c0_i32 = arith.constant 0 : i32
    %c0_i32_0 = arith.constant 0 : i32
    %c0_i32_1 = arith.constant 0 : i32
    %c0_i32_2 = arith.constant 0 : i32
    return %c0_i32, %c0_i32_0, %c0_i32_1 : i32, i32, i32
  }
  func.func @transform_7(%arg0: i32) -> (i32, i32, i32) {
    %c0_i32 = arith.constant 0 : i32
    %c0_i32_0 = arith.constant 0 : i32
    %c0_i32_1 = arith.constant 0 : i32
    %c0_i32_2 = arith.constant 0 : i32
    return %c0_i32, %c0_i32_0, %c0_i32_1 : i32, i32, i32
  }
  func.func @transform_8(%arg0: i32) -> (i32, i32, i32) {
    %c0_i32 = arith.constant 0 : i32
    %c0_i32_0 = arith.constant 0 : i32
    %c0_i32_1 = arith.constant 0 : i32
    %c0_i32_2 = arith.constant 0 : i32
    return %c0_i32, %c0_i32_0, %c0_i32_1 : i32, i32, i32
  }
  func.func @transform_9(%arg0: i32) -> (i32, i32, i32) {
    %c0_i32 = arith.constant 0 : i32
    %c0_i32_0 = arith.constant 0 : i32
    %c0_i32_1 = arith.constant 0 : i32
    %c0_i32_2 = arith.constant 0 : i32
    return %c0_i32, %c0_i32_0, %c0_i32_1 : i32, i32, i32
  }
  func.func @transform_10(%arg0: i32) -> (i32, i32, i32) {
    %c0_i32 = arith.constant 0 : i32
    %c0_i32_0 = arith.constant 0 : i32
    %c0_i32_1 = arith.constant 0 : i32
    %c0_i32_2 = arith.constant 0 : i32
    return %c0_i32, %c0_i32_0, %c0_i32_1 : i32, i32, i32
  }
  func.func @transform_11(%arg0: i32) -> (i32, i32, i32) {
    %c0_i32 = arith.constant 0 : i32
    %c0_i32_0 = arith.constant 0 : i32
    %c0_i32_1 = arith.constant 0 : i32
    %c0_i32_2 = arith.constant 0 : i32
    return %c0_i32, %c0_i32_0, %c0_i32_1 : i32, i32, i32
  }
  func.func @transform_12(%arg0: i32) -> (i32, i32, i32) {
    %c0_i32 = arith.constant 0 : i32
    %c0_i32_0 = arith.constant 0 : i32
    %c0_i32_1 = arith.constant 0 : i32
    %c0_i32_2 = arith.constant 0 : i32
    return %c0_i32, %c0_i32_0, %c0_i32_1 : i32, i32, i32
  }
  func.func @transform_13(%arg0: i32) -> (i32, i32) {
    %c0_i32 = arith.constant 0 : i32
    %c0_i32_0 = arith.constant 0 : i32
    %c0_i32_1 = arith.constant 0 : i32
    return %c0_i32, %c0_i32_0 : i32, i32
  }
  func.func @transform_14(%arg0: i32) -> (i32, i32) {
    %c0_i32 = arith.constant 0 : i32
    %c0_i32_0 = arith.constant 0 : i32
    %c0_i32_1 = arith.constant 0 : i32
    return %c0_i32, %c0_i32_0 : i32, i32
  }
  func.func @transform_15(%arg0: i32) -> (i32, i32) {
    %c0_i32 = arith.constant 0 : i32
    %c0_i32_0 = arith.constant 0 : i32
    return %arg0, %c0_i32 : i32, i32
  }
}

</mosaic_0001>

<llo_original>
// kernel: tpu_custom_call.1
$region0: #{tpu_custom_call.1}
  #allocation0 [shape = 'u32[]', space=smem, size = 0x4, offset = 0x4, fixed_abs, tag = 'smem constant byte address 0x4 - core index']
  #allocation1 [shape = 'u32[144,128]{1,0:T(1,128)}', space=vmem, size = 0x12000, scoped, tag = 'internal scratch']
  %s0 = inlined_call_operand.hbm [shape: bf16[64,128], index: 0, kind: input, shape index: {}]
  %s1 = inlined_call_operand.hbm [shape: bf16[128,128], index: 1, kind: input, shape index: {}]
  %s2 = inlined_call_operand.vmem [shape: f32[1,128], index: 2, kind: input, shape index: {}]
  %s3 = inlined_call_operand.hbm [shape: f32[1,128], index: 3, kind: input, shape index: {}]
  %s4 = inlined_call_operand.vmem [shape: f32[1,128], index: 4, kind: input, shape index: {}]
  %s5 = inlined_call_operand.hbm [shape: bf16[2,128,128], index: 5, kind: input, shape index: {}]
  %s6 = inlined_call_operand.vmem [shape: f32[2,1,128], index: 6, kind: input, shape index: {}]
  %s7 = inlined_call_operand.vmem [shape: f32[2,1,128], index: 7, kind: input, shape index: {}]
  %s8 = inlined_call_operand.vmem [shape: f32[2,1,128], index: 8, kind: input, shape index: {}]
  %s9 = inlined_call_operand.hbm [shape: bf16[2,128,128], index: 9, kind: input, shape index: {}]
  %s10 = inlined_call_operand.vmem [shape: f32[2,1,128], index: 10, kind: input, shape index: {}]
  %s11 = inlined_call_operand.vmem [shape: f32[2,1,128], index: 11, kind: input, shape index: {}]
  %s12 = inlined_call_operand.vmem [shape: f32[2,1,128], index: 12, kind: input, shape index: {}]
  %s13 = inlined_call_operand.hbm [shape: bf16[128,128], index: 13, kind: input, shape index: {}]
  %s14 = inlined_call_operand.vmem [shape: f32[1,128], index: 14, kind: input, shape index: {}]
  %s15 = inlined_call_operand.hbm [shape: f32[64,128], index: 15, kind: output, shape index: {}]
  %s16 = sld [smem:[#allocation0]]
  $region94: #{tpu_custom_call.1} parent=0
    _
  %s18 = ssub.s32 1, %s16
  %s19 = scalar_select 0, %s18, %s16
  $region1: #{tpu_custom_call.1} parent=0
    #allocation2 [shape = 'u8[16384]{0}', space=vmem, size = 0x4000, scoped, tag = 'input window, operand 0, single buffered']
    #allocation3 [shape = 's32[1]{0}', space=sflag, size = 0x4, scoped, tag = 'scoped memory for tpu_custom_call.1']
    #allocation4 [shape = 's32[1]{0}', space=sflag, size = 0x4, scoped, tag = 'scoped memory for tpu_custom_call.1']
    #allocation5 [shape = 'u8[32768]{0}', space=vmem, size = 0x8000, scoped, tag = 'input window, operand 1, single buffered']
    #allocation6 [shape = 's32[1]{0}', space=sflag, size = 0x4, scoped, tag = 'scoped memory for tpu_custom_call.1']
    #allocation7 [shape = 'u8[512]{0}', space=vmem, size = 0x400, scoped, tag = 'input window, operand 3, single buffered']
    #allocation8 [shape = 'u8[65536]{0}', space=vmem, size = 0x10000, scoped, tag = 'input window, operand 5, single buffered']
    #allocation9 [shape = 's32[1]{0}', space=sflag, size = 0x4, scoped, tag = 'scoped memory for tpu_custom_call.1']
    #allocation10 [shape = 'u8[65536]{0}', space=vmem, size = 0x10000, scoped, tag = 'input window, operand 9, single buffered']
    #allocation11 [shape = 'u8[32768]{0}', space=vmem, size = 0x8000, scoped, tag = 'input window, operand 13, single buffered']
    #allocation12 [shape = 's32[1]{0}', space=sflag, size = 0x4, scoped, tag = 'scoped memory for tpu_custom_call.1']
    #allocation13 [shape = 'u8[32768]{0}', space=vmem, size = 0x8000, scoped, tag = 'output window, operand 0, single buffered']
    %20 = vsyncpa [#allocation3], 0
    %21 = vsyncpa [#allocation6], 0
    %22 = vsyncpa [#allocation9], 0
    %23 = vsyncpa [#allocation12], 0
    %24 = vsyncpa [#allocation4], 0
    // Predicated region
    $region2: #{tpu_custom_call.1} parent=1 // pred_check
      _
    $region3: #{tpu_custom_call.1} parent=1 // pred_check_branch
      %26 = sbr.rel (0) target = $region5
    $region4: #{tpu_custom_call.1} parent=1 // pred_region
      %s28 = ssub.s32 512, 512
      %29 = vsyncadd [#allocation3], %s28
      %s30 = sshll.u32 [#allocation2], 4
      %s31 = int_to_ptr.vmem [resolvable:$true] %s30
      %36 = dma.hbm_to_vmem [thread:$0]  %s0, 512, %s31, [#allocation3], 64, 64, 4
    $region5: #{tpu_custom_call.1} parent=1 // pred_fallthru
      _
    // Predicated region
    $region6: #{tpu_custom_call.1} parent=1 // pred_check
      _
    $region7: #{tpu_custom_call.1} parent=1 // pred_check_branch
      %38 = sbr.rel (0) target = $region9
    $region8: #{tpu_custom_call.1} parent=1 // pred_region
      %s40 = ssub.s32 1024, 1024
      %41 = vsyncadd [#allocation6], %s40
      %s42 = sshll.u32 [#allocation5], 4
      %s43 = int_to_ptr.vmem [resolvable:$true] %s42
      %48 = dma.hbm_to_vmem [thread:$0]  %s1, 1024, %s43, [#allocation6], 64, 64, 4
    $region9: #{tpu_custom_call.1} parent=1 // pred_fallthru
      _
    // Predicated region
    $region10: #{tpu_custom_call.1} parent=1 // pred_check
      _
    $region11: #{tpu_custom_call.1} parent=1 // pred_check_branch
      %50 = sbr.rel (0) target = $region13
    $region12: #{tpu_custom_call.1} parent=1 // pred_region
      _
    $region13: #{tpu_custom_call.1} parent=1 // pred_fallthru
      _
    // Predicated region
    $region14: #{tpu_custom_call.1} parent=1 // pred_check
      _
    $region15: #{tpu_custom_call.1} parent=1 // pred_check_branch
      %52 = sbr.rel (0) target = $region17
    $region16: #{tpu_custom_call.1} parent=1 // pred_region
      %s54 = ssub.s32 16, 16
      %55 = vsyncadd [#allocation6], %s54
      %s57 = sshll.u32 [#allocation7], 4
      %s58 = int_to_ptr.vmem [resolvable:$true] %s57
      %60 = dma.hbm_to_vmem [thread:$0]  %s3, 16, %s58, [#allocation6]
    $region17: #{tpu_custom_call.1} parent=1 // pred_fallthru
      _
    // Predicated region
    $region18: #{tpu_custom_call.1} parent=1 // pred_check
      _
    $region19: #{tpu_custom_call.1} parent=1 // pred_check_branch
      %62 = sbr.rel (0) target = $region21
    $region20: #{tpu_custom_call.1} parent=1 // pred_region
      _
    $region21: #{tpu_custom_call.1} parent=1 // pred_fallthru
      _
    // Predicated region
    $region22: #{tpu_custom_call.1} parent=1 // pred_check
      _
    $region23: #{tpu_custom_call.1} parent=1 // pred_check_branch
      %64 = sbr.rel (0) target = $region25
    $region24: #{tpu_custom_call.1} parent=1 // pred_region
      %s66 = ssub.s32 2048, 2048
      %67 = vsyncadd [#allocation9], %s66
      %s68 = sshll.u32 [#allocation8], 4
      %s69 = int_to_ptr.vmem [resolvable:$true] %s68
      %74 = dma.hbm_to_vmem [thread:$0]  %s5, 2048, %s69, [#allocation9], 64, 64, 4
    $region25: #{tpu_custom_call.1} parent=1 // pred_fallthru
      _
    // Predicated region
    $region26: #{tpu_custom_call.1} parent=1 // pred_check
      _
    $region27: #{tpu_custom_call.1} parent=1 // pred_check_branch
      %76 = sbr.rel (0) target = $region29
    $region28: #{tpu_custom_call.1} parent=1 // pred_region
      _
    $region29: #{tpu_custom_call.1} parent=1 // pred_fallthru
      _
    // Predicated region
    $region30: #{tpu_custom_call.1} parent=1 // pred_check
      _
    $region31: #{tpu_custom_call.1} parent=1 // pred_check_branch
      %78 = sbr.rel (0) target = $region33
    $region32: #{tpu_custom_call.1} parent=1 // pred_region
      _
    $region33: #{tpu_custom_call.1} parent=1 // pred_fallthru
      _
    // Predicated region
    $region34: #{tpu_custom_call.1} parent=1 // pred_check
      _
    $region35: #{tpu_custom_call.1} parent=1 // pred_check_branch
      %80 = sbr.rel (0) target = $region37
    $region36: #{tpu_custom_call.1} parent=1 // pred_region
      _
    $region37: #{tpu_custom_call.1} parent=1 // pred_fallthru
      _
    // Predicated region
    $region38: #{tpu_custom_call.1} parent=1 // pred_check
      _
    $region39: #{tpu_custom_call.1} parent=1 // pred_check_branch
      %82 = sbr.rel (0) target = $region41
    $region40: #{tpu_custom_call.1} parent=1 // pred_region
      %s84 = ssub.s32 2048, 2048
      %85 = vsyncadd [#allocation9], %s84
      %s86 = sshll.u32 [#allocation10], 4
      %s87 = int_to_ptr.vmem [resolvable:$true] %s86
      %92 = dma.hbm_to_vmem [thread:$0]  %s9, 2048, %s87, [#allocation9], 64, 64, 4
    $region41: #{tpu_custom_call.1} parent=1 // pred_fallthru
      _
    // Predicated region
    $region42: #{tpu_custom_call.1} parent=1 // pred_check
      _
    $region43: #{tpu_custom_call.1} parent=1 // pred_check_branch
      %94 = sbr.rel (0) target = $region45
    $region44: #{tpu_custom_call.1} parent=1 // pred_region
      _
    $region45: #{tpu_custom_call.1} parent=1 // pred_fallthru
      _
    // Predicated region
    $region46: #{tpu_custom_call.1} parent=1 // pred_check
      _
    $region47: #{tpu_custom_call.1} parent=1 // pred_check_branch
      %96 = sbr.rel (0) target = $region49
    $region48: #{tpu_custom_call.1} parent=1 // pred_region
      _
    $region49: #{tpu_custom_call.1} parent=1 // pred_fallthru
      _
    // Predicated region
    $region50: #{tpu_custom_call.1} parent=1 // pred_check
      _
    $region51: #{tpu_custom_call.1} parent=1 // pred_check_branch
      %98 = sbr.rel (0) target = $region53
    $region52: #{tpu_custom_call.1} parent=1 // pred_region
      _
    $region53: #{tpu_custom_call.1} parent=1 // pred_fallthru
      _
    // Predicated region
    $region54: #{tpu_custom_call.1} parent=1 // pred_check
      _
    $region55: #{tpu_custom_call.1} parent=1 // pred_check_branch
      %100 = sbr.rel (0) target = $region57
    $region56: #{tpu_custom_call.1} parent=1 // pred_region
      %s102 = ssub.s32 1024, 1024
      %103 = vsyncadd [#allocation12], %s102
      %s104 = sshll.u32 [#allocation11], 4
      %s105 = int_to_ptr.vmem [resolvable:$true] %s104
      %110 = dma.hbm_to_vmem [thread:$0]  %s13, 1024, %s105, [#allocation12], 64, 64, 4
    $region57: #{tpu_custom_call.1} parent=1 // pred_fallthru
      _
    // Predicated region
    $region58: #{tpu_custom_call.1} parent=1 // pred_check
      _
    $region59: #{tpu_custom_call.1} parent=1 // pred_check_branch
      %112 = sbr.rel (0) target = $region61
    $region60: #{tpu_custom_call.1} parent=1 // pred_region
      _
    $region61: #{tpu_custom_call.1} parent=1 // pred_fallthru
      _
    // Predicated region
    $region62: #{tpu_custom_call.1} parent=1 // pred_check
      _
    $region63: #{tpu_custom_call.1} parent=1 // pred_check_branch
      %114 = sbr.rel (0) target = $region65
    $region64: #{tpu_custom_call.1} parent=1 // pred_region
      %115 = dma.done [#allocation3], 512
    $region65: #{tpu_custom_call.1} parent=1 // pred_fallthru
      _
    // Predicated region
    $region66: #{tpu_custom_call.1} parent=1 // pred_check
      _
    $region67: #{tpu_custom_call.1} parent=1 // pred_check_branch
      %117 = sbr.rel (0) target = $region69
    $region68: #{tpu_custom_call.1} parent=1 // pred_region
      %118 = dma.done [#allocation6], 1024
    $region69: #{tpu_custom_call.1} parent=1 // pred_fallthru
      _
    // Predicated region
    $region70: #{tpu_custom_call.1} parent=1 // pred_check
      _
    $region71: #{tpu_custom_call.1} parent=1 // pred_check_branch
      %120 = sbr.rel (0) target = $region73
    $region72: #{tpu_custom_call.1} parent=1 // pred_region
      %121 = dma.done [#allocation6], 16
    $region73: #{tpu_custom_call.1} parent=1 // pred_fallthru
      _
    // Predicated region
    $region74: #{tpu_custom_call.1} parent=1 // pred_check
      _
    $region75: #{tpu_custom_call.1} parent=1 // pred_check_branch
      %123 = sbr.rel (0) target = $region77
    $region76: #{tpu_custom_call.1} parent=1 // pred_region
      %124 = dma.done [#allocation9], 2048
    $region77: #{tpu_custom_call.1} parent=1 // pred_fallthru
      _
    // Predicated region
    $region78: #{tpu_custom_call.1} parent=1 // pred_check
      _
    $region79: #{tpu_custom_call.1} parent=1 // pred_check_branch
      %126 = sbr.rel (0) target = $region81
    $region80: #{tpu_custom_call.1} parent=1 // pred_region
      %127 = dma.done [#allocation9], 2048
    $region81: #{tpu_custom_call.1} parent=1 // pred_fallthru
      _
    // Predicated region
    $region82: #{tpu_custom_call.1} parent=1 // pred_check
      _
    $region83: #{tpu_custom_call.1} parent=1 // pred_check_branch
      %129 = sbr.rel (0) target = $region85
    $region84: #{tpu_custom_call.1} parent=1 // pred_region
      %130 = dma.done [#allocation12], 1024
    $region85: #{tpu_custom_call.1} parent=1 // pred_fallthru
      _
    %v132 = vld [vmem:[#allocation2] sm:$0xf]
    %v133 = vld [vmem:[#allocation2 + $0x4] sm:$0xf]
    %v134 = vld [vmem:[#allocation2 + $0x8] sm:$0xf]
    %v135 = vld [vmem:[#allocation2 + $0xc] sm:$0xf]
    %v136 = vld [vmem:[#allocation2 + $0x10] sm:$0xf]
    %v137 = vld [vmem:[#allocation2 + $0x14] sm:$0xf]
    %v138 = vld [vmem:[#allocation2 + $0x18] sm:$0xf]
    %v139 = vld [vmem:[#allocation2 + $0x1c] sm:$0xf]
    %v140 = vld [vmem:[#allocation5] sm:$0xf]
    %v141 = vld [vmem:[#allocation5 + $0x4] sm:$0xf]
    %v142 = vld [vmem:[#allocation5 + $0x8] sm:$0xf]
    %v143 = vld [vmem:[#allocation5 + $0xc] sm:$0xf]
    %v144 = vld [vmem:[#allocation5 + $0x10] sm:$0xf]
    %v145 = vld [vmem:[#allocation5 + $0x14] sm:$0xf]
    %v146 = vld [vmem:[#allocation5 + $0x18] sm:$0xf]
    %v147 = vld [vmem:[#allocation5 + $0x1c] sm:$0xf]
    %v148 = vld [vmem:[#allocation5 + $0x20] sm:$0xf]
    %v149 = vld [vmem:[#allocation5 + $0x24] sm:$0xf]
    %v150 = vld [vmem:[#allocation5 + $0x28] sm:$0xf]
    %v151 = vld [vmem:[#allocation5 + $0x2c] sm:$0xf]
    %v152 = vld [vmem:[#allocation5 + $0x30] sm:$0xf]
    %v153 = vld [vmem:[#allocation5 + $0x34] sm:$0xf]
    %v154 = vld [vmem:[#allocation5 + $0x38] sm:$0xf]
    %v155 = vld [vmem:[#allocation5 + $0x3c] sm:$0xf]
    %v156 = vld [vmem:[%s2] sm:$0x1]
    %v158 = vlaneseq
    %v159 = vshrl.u32 %v158, 7
    %v160 = vsub.s32 0, %v159
    %v161 = vrot.slane %v156, %v160
    %v171 = vunpack.c.l.b16 %v132
    %v172 = vunpack.c.l.b16 %v133
    %v173 = vunpack.c.l.b16 %v134
    %v174 = vunpack.c.l.b16 %v135
    %v175 = vunpack.c.l.b16 %v136
    %v176 = vunpack.c.l.b16 %v137
    %v177 = vunpack.c.l.b16 %v138
    %v178 = vunpack.c.l.b16 %v139
    %v179 = vpack.c.b16 %v172, %v171
    %v180 = vpack.c.b16 %v174, %v173
    %v181 = vpack.c.b16 %v176, %v175
    %v182 = vpack.c.b16 %v178, %v177
    %v203 = vunpack.c.l.b16 %v140
    %v204 = vunpack.c.l.b16 %v141
    %v205 = vunpack.c.l.b16 %v142
    %v206 = vunpack.c.l.b16 %v143
    %v207 = vunpack.c.l.b16 %v144
    %v208 = vunpack.c.l.b16 %v145
    %v209 = vunpack.c.l.b16 %v146
    %v210 = vunpack.c.l.b16 %v147
    %v211 = vunpack.c.l.b16 %v148
    %v212 = vunpack.c.l.b16 %v149
    %v213 = vunpack.c.l.b16 %v150
    %v214 = vunpack.c.l.b16 %v151
    %v215 = vunpack.c.l.b16 %v152
    %v216 = vunpack.c.l.b16 %v153
    %v217 = vunpack.c.l.b16 %v154
    %v218 = vunpack.c.l.b16 %v155
    %v219 = vpack.c.b16 %v204, %v203
    %v220 = vpack.c.b16 %v206, %v205
    %v221 = vpack.c.b16 %v208, %v207
    %v222 = vpack.c.b16 %v210, %v209
    %v223 = vpack.c.b16 %v212, %v211
    %v224 = vpack.c.b16 %v214, %v213
    %v225 = vpack.c.b16 %v216, %v215
    %v226 = vpack.c.b16 %v218, %v217
    %235 = vmatprep.subr.bf16.mxu0 0
    %236 = vmatpush1.bf16.msra.mxu0 %v219
    %237 = vmatprep.subr.bf16.mxu0 0
    %238 = vmatpush1.bf16.msra.mxu0 %v220
    %239 = vmatprep.subr.bf16.mxu0 0
    %240 = vmatpush1.bf16.msra.mxu0 %v221
    %241 = vmatprep.subr.bf16.mxu0 0
    %242 = vmatpush1.bf16.msra.mxu0 %v222
    %243 = vmatprep.subr.bf16.mxu0 0
    %244 = vmatpush1.bf16.msra.mxu0 %v223
    %245 = vmatprep.subr.bf16.mxu0 0
    %246 = vmatpush1.bf16.msra.mxu0 %v224
    %247 = vmatprep.subr.bf16.mxu0 0
    %248 = vmatpush1.bf16.msra.mxu0 %v225
    %249 = vmatprep.subr.bf16.mxu0 0
    %250 = vmatpush1.bf16.msra.mxu0 %v226
    %251 = vmatprep.subr.bf16.mxu0 0
    %252 = vmatpush1.bf16.msra.mxu0 0
    %253 = vmatprep.subr.bf16.mxu0 0
    %254 = vmatpush1.bf16.msra.mxu0 0
    %255 = vmatprep.subr.bf16.mxu0 0
    %256 = vmatpush1.bf16.msra.mxu0 0
    %257 = vmatprep.subr.bf16.mxu0 0
    %258 = vmatpush1.bf16.msra.mxu0 0
    %259 = vmatprep.subr.bf16.mxu0 0
    %260 = vmatpush1.bf16.msra.mxu0 0
    %261 = vmatprep.subr.bf16.mxu0 0
    %262 = vmatpush1.bf16.msra.mxu0 0
    %263 = vmatprep.subr.bf16.mxu0 0
    %264 = vmatpush1.bf16.msra.mxu0 0
    %265 = vmatprep.subr.bf16.mxu0 0
    %266 = vmatpush1.bf16.msra.mxu0 0
    %267 = vmatprep.mubr.bf16.mxu0 0
    %268 = vmatmul.mubr.bf16.gmra.mrb[0].mxu0 %v179
    %v269 = vpop.f32.mrb[0].mxu0
    %v270 = vadd.f32 %v161, %v269
    %v271 = vpop.f32.mrb[0].mxu0
    %v272 = vpop.f32.mrb[0].mxu0
    %v273 = vadd.f32 %v161, %v272
    %v274 = vpop.f32.mrb[0].mxu0
    %275 = vmatprep.mubr.bf16.mxu0 0
    %276 = vmatmul.mubr.bf16.gmra.mrb[0].mxu0 %v180
    %v277 = vpop.f32.mrb[0].mxu0
    %v278 = vadd.f32 %v161, %v277
    %v279 = vpop.f32.mrb[0].mxu0
    %v280 = vpop.f32.mrb[0].mxu0
    %v281 = vadd.f32 %v161, %v280
    %v282 = vpop.f32.mrb[0].mxu0
    %283 = vmatprep.mubr.bf16.mxu0 0
    %284 = vmatmul.mubr.bf16.gmra.mrb[0].mxu0 %v181
    %v285 = vpop.f32.mrb[0].mxu0
    %v286 = vadd.f32 %v161, %v285
    %v287 = vpop.f32.mrb[0].mxu0
    %v288 = vpop.f32.mrb[0].mxu0
    %v289 = vadd.f32 %v161, %v288
    %v290 = vpop.f32.mrb[0].mxu0
    %291 = vmatprep.mubr.bf16.mxu0 0
    %292 = vmatmul.mubr.bf16.gmra.mrb[0].mxu0 %v182
    %v293 = vpop.f32.mrb[0].mxu0
    %v294 = vadd.f32 %v161, %v293
    %v295 = vpop.f32.mrb[0].mxu0
    %v296 = vpop.f32.mrb[0].mxu0
    %v297 = vadd.f32 %v161, %v296
    %v298 = vpop.f32.mrb[0].mxu0
    %299 = vdwg.mxu0
    %v300 = vmax.f32 %v270, 0.0
    %v301 = vmax.f32 %v273, 0.0
    %v302 = vmax.f32 %v278, 0.0
    %v303 = vmax.f32 %v281, 0.0
    %v304 = vmax.f32 %v286, 0.0
    %v305 = vmax.f32 %v289, 0.0
    %v306 = vmax.f32 %v294, 0.0
    %v307 = vmax.f32 %v297, 0.0
    %v308 = vld [vmem:[#allocation7] sm:$0x1]
    %v309 = vld [vmem:[%s4] sm:$0x1]
    %310 = vadd.xlane.f32.xlu0 %v300
    %v311 = vpop.xlane.xlu0 %310
    %312 = vadd.xlane.f32.xlu0 %v301
    %v313 = vpop.xlane.xlu0 %312
    %314 = vadd.xlane.f32.xlu0 %v302
    %v315 = vpop.xlane.xlu0 %314
    %316 = vadd.xlane.f32.xlu0 %v303
    %v317 = vpop.xlane.xlu0 %316
    %318 = vadd.xlane.f32.xlu0 %v304
    %v319 = vpop.xlane.xlu0 %318
    %320 = vadd.xlane.f32.xlu0 %v305
    %v321 = vpop.xlane.xlu0 %320
    %322 = vadd.xlane.f32.xlu0 %v306
    %v323 = vpop.xlane.xlu0 %322
    %324 = vadd.xlane.f32.xlu0 %v307
    %v325 = vpop.xlane.xlu0 %324
    %v326 = vmul.f32 %v311, 0.03125
    %v327 = vmul.f32 %v313, 0.03125
    %v328 = vmul.f32 %v315, 0.03125
    %v329 = vmul.f32 %v317, 0.03125
    %v330 = vmul.f32 %v319, 0.03125
    %v331 = vmul.f32 %v321, 0.03125
    %v332 = vmul.f32 %v323, 0.03125
    %v333 = vmul.f32 %v325, 0.03125
    %v334 = vmul.f32 %v300, %v300
    %v335 = vmul.f32 %v301, %v301
    %v336 = vmul.f32 %v302, %v302
    %v337 = vmul.f32 %v303, %v303
    %v338 = vmul.f32 %v304, %v304
    %v339 = vmul.f32 %v305, %v305
    %v340 = vmul.f32 %v306, %v306
    %v341 = vmul.f32 %v307, %v307
    %342 = vadd.xlane.f32.xlu0 %v334
    %v343 = vpop.xlane.xlu0 %342
    %344 = vadd.xlane.f32.xlu0 %v335
    %v345 = vpop.xlane.xlu0 %344
    %346 = vadd.xlane.f32.xlu0 %v336
    %v347 = vpop.xlane.xlu0 %346
    %348 = vadd.xlane.f32.xlu0 %v337
    %v349 = vpop.xlane.xlu0 %348
    %350 = vadd.xlane.f32.xlu0 %v338
    %v351 = vpop.xlane.xlu0 %350
    %352 = vadd.xlane.f32.xlu0 %v339
    %v353 = vpop.xlane.xlu0 %352
    %354 = vadd.xlane.f32.xlu0 %v340
    %v355 = vpop.xlane.xlu0 %354
    %356 = vadd.xlane.f32.xlu0 %v341
    %v357 = vpop.xlane.xlu0 %356
    %v358 = vmul.f32 %v343, 0.03125
    %v359 = vmul.f32 %v345, 0.03125
    %v360 = vmul.f32 %v347, 0.03125
    %v361 = vmul.f32 %v349, 0.03125
    %v362 = vmul.f32 %v351, 0.03125
    %v363 = vmul.f32 %v353, 0.03125
    %v364 = vmul.f32 %v355, 0.03125
    %v365 = vmul.f32 %v357, 0.03125
    %v366 = vmul.f32 %v326, %v326
    %v367 = vmul.f32 %v327, %v327
    %v368 = vmul.f32 %v328, %v328
    %v369 = vmul.f32 %v329, %v329
    %v370 = vmul.f32 %v330, %v330
    %v371 = vmul.f32 %v331, %v331
    %v372 = vmul.f32 %v332, %v332
    %v373 = vmul.f32 %v333, %v333
    %v374 = vsub.f32 %v358, %v366
    %v375 = vsub.f32 %v359, %v367
    %v376 = vsub.f32 %v360, %v368
    %v377 = vsub.f32 %v361, %v369
    %v378 = vsub.f32 %v362, %v370
    %v379 = vsub.f32 %v363, %v371
    %v380 = vsub.f32 %v364, %v372
    %v381 = vsub.f32 %v365, %v373
    %v382 = vsub.f32 %v300, %v326
    %v383 = vsub.f32 %v301, %v327
    %v384 = vsub.f32 %v302, %v328
    %v385 = vsub.f32 %v303, %v329
    %v386 = vsub.f32 %v304, %v330
    %v387 = vsub.f32 %v305, %v331
    %v388 = vsub.f32 %v306, %v332
    %v389 = vsub.f32 %v307, %v333
    %v390 = vadd.f32 %v374, 1e-05
    %v391 = vadd.f32 %v375, 1e-05
    %v392 = vadd.f32 %v376, 1e-05
    %v393 = vadd.f32 %v377, 1e-05
    %v394 = vadd.f32 %v378, 1e-05
    %v395 = vadd.f32 %v379, 1e-05
    %v396 = vadd.f32 %v380, 1e-05
    %v397 = vadd.f32 %v381, 1e-05
    %v398 = vrsqrt.pop %v390
    %v399 = vrsqrt.pop %v391
    %v400 = vrsqrt.pop %v392
    %v401 = vrsqrt.pop %v393
    %v402 = vrsqrt.pop %v394
    %v403 = vrsqrt.pop %v395
    %v404 = vrsqrt.pop %v396
    %v405 = vrsqrt.pop %v397
    %v406 = vmul.f32 %v382, %v398
    %v407 = vmul.f32 %v383, %v399
    %v408 = vmul.f32 %v384, %v400
    %v409 = vmul.f32 %v385, %v401
    %v410 = vmul.f32 %v386, %v402
    %v411 = vmul.f32 %v387, %v403
    %v412 = vmul.f32 %v388, %v404
    %v413 = vmul.f32 %v389, %v405
    %v415 = vlaneseq
    %v416 = vshrl.u32 %v415, 7
    %v417 = vsub.s32 0, %v416
    %v418 = vrot.slane %v308, %v417
    %v420 = vmul.f32 %v406, %v418
    %v421 = vmul.f32 %v407, %v418
    %v422 = vmul.f32 %v408, %v418
    %v423 = vmul.f32 %v409, %v418
    %v424 = vmul.f32 %v410, %v418
    %v425 = vmul.f32 %v411, %v418
    %v426 = vmul.f32 %v412, %v418
    %v427 = vmul.f32 %v413, %v418
    %v429 = vlaneseq
    %v430 = vshrl.u32 %v429, 7
    %v431 = vsub.s32 0, %v430
    %v432 = vrot.slane %v309, %v431
    %v434 = vadd.f32 %v420, %v432
    %v435 = vadd.f32 %v421, %v432
    %v436 = vadd.f32 %v422, %v432
    %v437 = vadd.f32 %v423, %v432
    %v438 = vadd.f32 %v424, %v432
    %v439 = vadd.f32 %v425, %v432
    %v440 = vadd.f32 %v426, %v432
    %v441 = vadd.f32 %v427, %v432
    %v442 = vpack.c.bf16 %v435, %v434
    %v443 = vpack.c.bf16 %v437, %v436
    %v444 = vpack.c.bf16 %v439, %v438
    %v445 = vpack.c.bf16 %v441, %v440
    %v446 = vld [vmem:[#allocation8] sm:$0xf]
    %v447 = vld [vmem:[#allocation8 + $0x4] sm:$0xf]
    %v448 = vld [vmem:[#allocation8 + $0x8] sm:$0xf]
    %v449 = vld [vmem:[#allocation8 + $0xc] sm:$0xf]
    %v450 = vld [vmem:[#allocation8 + $0x10] sm:$0xf]
    %v451 = vld [vmem:[#allocation8 + $0x14] sm:$0xf]
    %v452 = vld [vmem:[#allocation8 + $0x18] sm:$0xf]
    %v453 = vld [vmem:[#allocation8 + $0x1c] sm:$0xf]
    %v454 = vld [vmem:[#allocation8 + $0x20] sm:$0xf]
    %v455 = vld [vmem:[#allocation8 + $0x24] sm:$0xf]
    %v456 = vld [vmem:[#allocation8 + $0x28] sm:$0xf]
    %v457 = vld [vmem:[#allocation8 + $0x2c] sm:$0xf]
    %v458 = vld [vmem:[#allocation8 + $0x30] sm:$0xf]
    %v459 = vld [vmem:[#allocation8 + $0x34] sm:$0xf]
    %v460 = vld [vmem:[#allocation8 + $0x38] sm:$0xf]
    %v461 = vld [vmem:[#allocation8 + $0x3c] sm:$0xf]
    %v462 = vld [vmem:[%s6] sm:$0x1]
    %v464 = vlaneseq
    %v465 = vshrl.u32 %v464, 7
    %v466 = vsub.s32 0, %v465
    %v467 = vrot.slane %v462, %v466
    %v485 = vunpack.c.l.b16 %v446
    %v486 = vunpack.c.l.b16 %v447
    %v487 = vunpack.c.l.b16 %v448
    %v488 = vunpack.c.l.b16 %v449
    %v489 = vunpack.c.l.b16 %v450
    %v490 = vunpack.c.l.b16 %v451
    %v491 = vunpack.c.l.b16 %v452
    %v492 = vunpack.c.l.b16 %v453
    %v493 = vunpack.c.l.b16 %v454
    %v494 = vunpack.c.l.b16 %v455
    %v495 = vunpack.c.l.b16 %v456
    %v496 = vunpack.c.l.b16 %v457
    %v497 = vunpack.c.l.b16 %v458
    %v498 = vunpack.c.l.b16 %v459
    %v499 = vunpack.c.l.b16 %v460
    %v500 = vunpack.c.l.b16 %v461
    %v501 = vpack.c.b16 %v486, %v485
    %v502 = vpack.c.b16 %v488, %v487
    %v503 = vpack.c.b16 %v490, %v489
    %v504 = vpack.c.b16 %v492, %v491
    %v505 = vpack.c.b16 %v494, %v493
    %v506 = vpack.c.b16 %v496, %v495
    %v507 = vpack.c.b16 %v498, %v497
    %v508 = vpack.c.b16 %v500, %v499
    %517 = vmatprep.subr.bf16.mxu0 0
    %518 = vmatpush1.bf16.msra.mxu0 %v501
    %519 = vmatprep.subr.bf16.mxu0 0
    %520 = vmatpush1.bf16.msra.mxu0 %v502
    %521 = vmatprep.subr.bf16.mxu0 0
    %522 = vmatpush1.bf16.msra.mxu0 %v503
    %523 = vmatprep.subr.bf16.mxu0 0
    %524 = vmatpush1.bf16.msra.mxu0 %v504
    %525 = vmatprep.subr.bf16.mxu0 0
    %526 = vmatpush1.bf16.msra.mxu0 %v505
    %527 = vmatprep.subr.bf16.mxu0 0
    %528 = vmatpush1.bf16.msra.mxu0 %v506
    %529 = vmatprep.subr.bf16.mxu0 0
    %530 = vmatpush1.bf16.msra.mxu0 %v507
    %531 = vmatprep.subr.bf16.mxu0 0
    %532 = vmatpush1.bf16.msra.mxu0 %v508
    %533 = vmatprep.subr.bf16.mxu0 0
    %534 = vmatpush1.bf16.msra.mxu0 0
    %535 = vmatprep.subr.bf16.mxu0 0
    %536 = vmatpush1.bf16.msra.mxu0 0
    %537 = vmatprep.subr.bf16.mxu0 0
    %538 = vmatpush1.bf16.msra.mxu0 0
    %539 = vmatprep.subr.bf16.mxu0 0
    %540 = vmatpush1.bf16.msra.mxu0 0
    %541 = vmatprep.subr.bf16.mxu0 0
    %542 = vmatpush1.bf16.msra.mxu0 0
    %543 = vmatprep.subr.bf16.mxu0 0
    %544 = vmatpush1.bf16.msra.mxu0 0
    %545 = vmatprep.subr.bf16.mxu0 0
    %546 = vmatpush1.bf16.msra.mxu0 0
    %547 = vmatprep.subr.bf16.mxu0 0
    %548 = vmatpush1.bf16.msra.mxu0 0
    %549 = vmatprep.mubr.bf16.mxu0 0
    %550 = vmatmul.mubr.bf16.gmra.mrb[0].mxu0 %v442
    %v551 = vpop.f32.mrb[0].mxu0
    %v552 = vadd.f32 %v467, %v551
    %v553 = vpop.f32.mrb[0].mxu0
    %v554 = vpop.f32.mrb[0].mxu0
    %v555 = vadd.f32 %v467, %v554
    %v556 = vpop.f32.mrb[0].mxu0
    %557 = vmatprep.mubr.bf16.mxu0 0
    %558 = vmatmul.mubr.bf16.gmra.mrb[0].mxu0 %v443
    %v559 = vpop.f32.mrb[0].mxu0
    %v560 = vadd.f32 %v467, %v559
    %v561 = vpop.f32.mrb[0].mxu0
    %v562 = vpop.f32.mrb[0].mxu0
    %v563 = vadd.f32 %v467, %v562
    %v564 = vpop.f32.mrb[0].mxu0
    %565 = vmatprep.mubr.bf16.mxu0 0
    %566 = vmatmul.mubr.bf16.gmra.mrb[0].mxu0 %v444
    %v567 = vpop.f32.mrb[0].mxu0
    %v568 = vadd.f32 %v467, %v567
    %v569 = vpop.f32.mrb[0].mxu0
    %v570 = vpop.f32.mrb[0].mxu0
    %v571 = vadd.f32 %v467, %v570
    %v572 = vpop.f32.mrb[0].mxu0
    %573 = vmatprep.mubr.bf16.mxu0 0
    %574 = vmatmul.mubr.bf16.gmra.mrb[0].mxu0 %v445
    %v575 = vpop.f32.mrb[0].mxu0
    %v576 = vadd.f32 %v467, %v575
    %v577 = vpop.f32.mrb[0].mxu0
    %v578 = vpop.f32.mrb[0].mxu0
    %v579 = vadd.f32 %v467, %v578
    %v580 = vpop.f32.mrb[0].mxu0
    %581 = vdwg.mxu0
    %v582 = vld [vmem:[%s7] sm:$0x1]
    %v583 = vld [vmem:[%s8] sm:$0x1]
    %584 = vadd.xlane.f32.xlu0 %v552
    %v585 = vpop.xlane.xlu0 %584
    %586 = vadd.xlane.f32.xlu0 %v555
    %v587 = vpop.xlane.xlu0 %586
    %588 = vadd.xlane.f32.xlu0 %v560
    %v589 = vpop.xlane.xlu0 %588
    %590 = vadd.xlane.f32.xlu0 %v563
    %v591 = vpop.xlane.xlu0 %590
    %592 = vadd.xlane.f32.xlu0 %v568
    %v593 = vpop.xlane.xlu0 %592
    %594 = vadd.xlane.f32.xlu0 %v571
    %v595 = vpop.xlane.xlu0 %594
    %596 = vadd.xlane.f32.xlu0 %v576
    %v597 = vpop.xlane.xlu0 %596
    %598 = vadd.xlane.f32.xlu0 %v579
    %v599 = vpop.xlane.xlu0 %598
    %v600 = vmul.f32 %v585, 0.03125
    %v601 = vmul.f32 %v587, 0.03125
    %v602 = vmul.f32 %v589, 0.03125
    %v603 = vmul.f32 %v591, 0.03125
    %v604 = vmul.f32 %v593, 0.03125
    %v605 = vmul.f32 %v595, 0.03125
    %v606 = vmul.f32 %v597, 0.03125
    %v607 = vmul.f32 %v599, 0.03125
    %v608 = vmul.f32 %v552, %v552
    %v609 = vmul.f32 %v555, %v555
    %v610 = vmul.f32 %v560, %v560
    %v611 = vmul.f32 %v563, %v563
    %v612 = vmul.f32 %v568, %v568
    %v613 = vmul.f32 %v571, %v571
    %v614 = vmul.f32 %v576, %v576
    %v615 = vmul.f32 %v579, %v579
    %616 = vadd.xlane.f32.xlu0 %v608
    %v617 = vpop.xlane.xlu0 %616
    %618 = vadd.xlane.f32.xlu0 %v609
    %v619 = vpop.xlane.xlu0 %618
    %620 = vadd.xlane.f32.xlu0 %v610
    %v621 = vpop.xlane.xlu0 %620
    %622 = vadd.xlane.f32.xlu0 %v611
    %v623 = vpop.xlane.xlu0 %622
    %624 = vadd.xlane.f32.xlu0 %v612
    %v625 = vpop.xlane.xlu0 %624
    %626 = vadd.xlane.f32.xlu0 %v613
    %v627 = vpop.xlane.xlu0 %626
    %628 = vadd.xlane.f32.xlu0 %v614
    %v629 = vpop.xlane.xlu0 %628
    %630 = vadd.xlane.f32.xlu0 %v615
    %v631 = vpop.xlane.xlu0 %630
    %v632 = vmul.f32 %v617, 0.03125
    %v633 = vmul.f32 %v619, 0.03125
    %v634 = vmul.f32 %v621, 0.03125
    %v635 = vmul.f32 %v623, 0.03125
    %v636 = vmul.f32 %v625, 0.03125
    %v637 = vmul.f32 %v627, 0.03125
    %v638 = vmul.f32 %v629, 0.03125
    %v639 = vmul.f32 %v631, 0.03125
    %v640 = vmul.f32 %v600, %v600
    %v641 = vmul.f32 %v601, %v601
    %v642 = vmul.f32 %v602, %v602
    %v643 = vmul.f32 %v603, %v603
    %v644 = vmul.f32 %v604, %v604
    %v645 = vmul.f32 %v605, %v605
    %v646 = vmul.f32 %v606, %v606
    %v647 = vmul.f32 %v607, %v607
    %v648 = vsub.f32 %v632, %v640
    %v649 = vsub.f32 %v633, %v641
    %v650 = vsub.f32 %v634, %v642
    %v651 = vsub.f32 %v635, %v643
    %v652 = vsub.f32 %v636, %v644
    %v653 = vsub.f32 %v637, %v645
    %v654 = vsub.f32 %v638, %v646
    %v655 = vsub.f32 %v639, %v647
    %v656 = vsub.f32 %v552, %v600
    %v657 = vsub.f32 %v555, %v601
    %v658 = vsub.f32 %v560, %v602
    %v659 = vsub.f32 %v563, %v603
    %v660 = vsub.f32 %v568, %v604
    %v661 = vsub.f32 %v571, %v605
    %v662 = vsub.f32 %v576, %v606
    %v663 = vsub.f32 %v579, %v607
    %v664 = vadd.f32 %v648, 1e-05
    %v665 = vadd.f32 %v649, 1e-05
    %v666 = vadd.f32 %v650, 1e-05
    %v667 = vadd.f32 %v651, 1e-05
    %v668 = vadd.f32 %v652, 1e-05
    %v669 = vadd.f32 %v653, 1e-05
    %v670 = vadd.f32 %v654, 1e-05
    %v671 = vadd.f32 %v655, 1e-05
    %v672 = vrsqrt.pop %v664
    %v673 = vrsqrt.pop %v665
    %v674 = vrsqrt.pop %v666
    %v675 = vrsqrt.pop %v667
    %v676 = vrsqrt.pop %v668
    %v677 = vrsqrt.pop %v669
    %v678 = vrsqrt.pop %v670
    %v679 = vrsqrt.pop %v671
    %v680 = vmul.f32 %v656, %v672
    %v681 = vmul.f32 %v657, %v673
    %v682 = vmul.f32 %v658, %v674
    %v683 = vmul.f32 %v659, %v675
    %v684 = vmul.f32 %v660, %v676
    %v685 = vmul.f32 %v661, %v677
    %v686 = vmul.f32 %v662, %v678
    %v687 = vmul.f32 %v663, %v679
    %v689 = vlaneseq
    %v690 = vshrl.u32 %v689, 7
    %v691 = vsub.s32 0, %v690
    %v692 = vrot.slane %v582, %v691
    %v694 = vmul.f32 %v680, %v692
    %v695 = vmul.f32 %v681, %v692
    %v696 = vmul.f32 %v682, %v692
    %v697 = vmul.f32 %v683, %v692
    %v698 = vmul.f32 %v684, %v692
    %v699 = vmul.f32 %v685, %v692
    %v700 = vmul.f32 %v686, %v692
    %v701 = vmul.f32 %v687, %v692
    %v703 = vlaneseq
    %v704 = vshrl.u32 %v703, 7
    %v705 = vsub.s32 0, %v704
    %v706 = vrot.slane %v583, %v705
    %v708 = vadd.f32 %v694, %v706
    %v709 = vadd.f32 %v695, %v706
    %v710 = vadd.f32 %v696, %v706
    %v711 = vadd.f32 %v697, %v706
    %v712 = vadd.f32 %v698, %v706
    %v713 = vadd.f32 %v699, %v706
    %v714 = vadd.f32 %v700, %v706
    %v715 = vadd.f32 %v701, %v706
    %v716 = vmax.f32 %v708, 0.0
    %v717 = vmax.f32 %v709, 0.0
    %v718 = vmax.f32 %v710, 0.0
    %v719 = vmax.f32 %v711, 0.0
    %v720 = vmax.f32 %v712, 0.0
    %v721 = vmax.f32 %v713, 0.0
    %v722 = vmax.f32 %v714, 0.0
    %v723 = vmax.f32 %v715, 0.0
    %v724 = vpack.c.bf16 %v717, %v716
    %v725 = vpack.c.bf16 %v719, %v718
    %v726 = vpack.c.bf16 %v721, %v720
    %v727 = vpack.c.bf16 %v723, %v722
    %v728 = vld [vmem:[#allocation10] sm:$0xf]
    %v729 = vld [vmem:[#allocation10 + $0x4] sm:$0xf]
    %v730 = vld [vmem:[#allocation10 + $0x8] sm:$0xf]
    %v731 = vld [vmem:[#allocation10 + $0xc] sm:$0xf]
    %v732 = vld [vmem:[#allocation10 + $0x10] sm:$0xf]
    %v733 = vld [vmem:[#allocation10 + $0x14] sm:$0xf]
    %v734 = vld [vmem:[#allocation10 + $0x18] sm:$0xf]
    %v735 = vld [vmem:[#allocation10 + $0x1c] sm:$0xf]
    %v736 = vld [vmem:[#allocation10 + $0x20] sm:$0xf]
    %v737 = vld [vmem:[#allocation10 + $0x24] sm:$0xf]
    %v738 = vld [vmem:[#allocation10 + $0x28] sm:$0xf]
    %v739 = vld [vmem:[#allocation10 + $0x2c] sm:$0xf]
    %v740 = vld [vmem:[#allocation10 + $0x30] sm:$0xf]
    %v741 = vld [vmem:[#allocation10 + $0x34] sm:$0xf]
    %v742 = vld [vmem:[#allocation10 + $0x38] sm:$0xf]
    %v743 = vld [vmem:[#allocation10 + $0x3c] sm:$0xf]
    %v744 = vld [vmem:[%s10] sm:$0x1]
    %v746 = vlaneseq
    %v747 = vshrl.u32 %v746, 7
    %v748 = vsub.s32 0, %v747
    %v749 = vrot.slane %v744, %v748
    %v767 = vunpack.c.l.b16 %v728
    %v768 = vunpack.c.l.b16 %v729
    %v769 = vunpack.c.l.b16 %v730
    %v770 = vunpack.c.l.b16 %v731
    %v771 = vunpack.c.l.b16 %v732
    %v772 = vunpack.c.l.b16 %v733
    %v773 = vunpack.c.l.b16 %v734
    %v774 = vunpack.c.l.b16 %v735
    %v775 = vunpack.c.l.b16 %v736
    %v776 = vunpack.c.l.b16 %v737
    %v777 = vunpack.c.l.b16 %v738
    %v778 = vunpack.c.l.b16 %v739
    %v779 = vunpack.c.l.b16 %v740
    %v780 = vunpack.c.l.b16 %v741
    %v781 = vunpack.c.l.b16 %v742
    %v782 = vunpack.c.l.b16 %v743
    %v783 = vpack.c.b16 %v768, %v767
    %v784 = vpack.c.b16 %v770, %v769
    %v785 = vpack.c.b16 %v772, %v771
    %v786 = vpack.c.b16 %v774, %v773
    %v787 = vpack.c.b16 %v776, %v775
    %v788 = vpack.c.b16 %v778, %v777
    %v789 = vpack.c.b16 %v780, %v779
    %v790 = vpack.c.b16 %v782, %v781
    %799 = vmatprep.subr.bf16.mxu0 0
    %800 = vmatpush1.bf16.msra.mxu0 %v783
    %801 = vmatprep.subr.bf16.mxu0 0
    %802 = vmatpush1.bf16.msra.mxu0 %v784
    %803 = vmatprep.subr.bf16.mxu0 0
    %804 = vmatpush1.bf16.msra.mxu0 %v785
    %805 = vmatprep.subr.bf16.mxu0 0
    %806 = vmatpush1.bf16.msra.mxu0 %v786
    %807 = vmatprep.subr.bf16.mxu0 0
    %808 = vmatpush1.bf16.msra.mxu0 %v787
    %809 = vmatprep.subr.bf16.mxu0 0
    %810 = vmatpush1.bf16.msra.mxu0 %v788
    %811 = vmatprep.subr.bf16.mxu0 0
    %812 = vmatpush1.bf16.msra.mxu0 %v789
    %813 = vmatprep.subr.bf16.mxu0 0
    %814 = vmatpush1.bf16.msra.mxu0 %v790
    %815 = vmatprep.subr.bf16.mxu0 0
    %816 = vmatpush1.bf16.msra.mxu0 0
    %817 = vmatprep.subr.bf16.mxu0 0
    %818 = vmatpush1.bf16.msra.mxu0 0
    %819 = vmatprep.subr.bf16.mxu0 0
    %820 = vmatpush1.bf16.msra.mxu0 0
    %821 = vmatprep.subr.bf16.mxu0 0
    %822 = vmatpush1.bf16.msra.mxu0 0
    %823 = vmatprep.subr.bf16.mxu0 0
    %824 = vmatpush1.bf16.msra.mxu0 0
    %825 = vmatprep.subr.bf16.mxu0 0
    %826 = vmatpush1.bf16.msra.mxu0 0
    %827 = vmatprep.subr.bf16.mxu0 0
    %828 = vmatpush1.bf16.msra.mxu0 0
    %829 = vmatprep.subr.bf16.mxu0 0
    %830 = vmatpush1.bf16.msra.mxu0 0
    %831 = vmatprep.mubr.bf16.mxu0 0
    %832 = vmatmul.mubr.bf16.gmra.mrb[0].mxu0 %v724
    %v833 = vpop.f32.mrb[0].mxu0
    %v834 = vadd.f32 %v749, %v833
    %v835 = vpop.f32.mrb[0].mxu0
    %v836 = vpop.f32.mrb[0].mxu0
    %v837 = vadd.f32 %v749, %v836
    %v838 = vpop.f32.mrb[0].mxu0
    %839 = vmatprep.mubr.bf16.mxu0 0
    %840 = vmatmul.mubr.bf16.gmra.mrb[0].mxu0 %v725
    %v841 = vpop.f32.mrb[0].mxu0
    %v842 = vadd.f32 %v749, %v841
    %v843 = vpop.f32.mrb[0].mxu0
    %v844 = vpop.f32.mrb[0].mxu0
    %v845 = vadd.f32 %v749, %v844
    %v846 = vpop.f32.mrb[0].mxu0
    %847 = vmatprep.mubr.bf16.mxu0 0
    %848 = vmatmul.mubr.bf16.gmra.mrb[0].mxu0 %v726
    %v849 = vpop.f32.mrb[0].mxu0
    %v850 = vadd.f32 %v749, %v849
    %v851 = vpop.f32.mrb[0].mxu0
    %v852 = vpop.f32.mrb[0].mxu0
    %v853 = vadd.f32 %v749, %v852
    %v854 = vpop.f32.mrb[0].mxu0
    %855 = vmatprep.mubr.bf16.mxu0 0
    %856 = vmatmul.mubr.bf16.gmra.mrb[0].mxu0 %v727
    %v857 = vpop.f32.mrb[0].mxu0
    %v858 = vadd.f32 %v749, %v857
    %v859 = vpop.f32.mrb[0].mxu0
    %v860 = vpop.f32.mrb[0].mxu0
    %v861 = vadd.f32 %v749, %v860
    %v862 = vpop.f32.mrb[0].mxu0
    %863 = vdwg.mxu0
    %v864 = vld [vmem:[%s11] sm:$0x1]
    %v865 = vld [vmem:[%s12] sm:$0x1]
    %866 = vadd.xlane.f32.xlu0 %v834
    %v867 = vpop.xlane.xlu0 %866
    %868 = vadd.xlane.f32.xlu0 %v837
    %v869 = vpop.xlane.xlu0 %868
    %870 = vadd.xlane.f32.xlu0 %v842
    %v871 = vpop.xlane.xlu0 %870
    %872 = vadd.xlane.f32.xlu0 %v845
    %v873 = vpop.xlane.xlu0 %872
    %874 = vadd.xlane.f32.xlu0 %v850
    %v875 = vpop.xlane.xlu0 %874
    %876 = vadd.xlane.f32.xlu0 %v853
    %v877 = vpop.xlane.xlu0 %876
    %878 = vadd.xlane.f32.xlu0 %v858
    %v879 = vpop.xlane.xlu0 %878
    %880 = vadd.xlane.f32.xlu0 %v861
    %v881 = vpop.xlane.xlu0 %880
    %v882 = vmul.f32 %v867, 0.03125
    %v883 = vmul.f32 %v869, 0.03125
    %v884 = vmul.f32 %v871, 0.03125
    %v885 = vmul.f32 %v873, 0.03125
    %v886 = vmul.f32 %v875, 0.03125
    %v887 = vmul.f32 %v877, 0.03125
    %v888 = vmul.f32 %v879, 0.03125
    %v889 = vmul.f32 %v881, 0.03125
    %v890 = vmul.f32 %v834, %v834
    %v891 = vmul.f32 %v837, %v837
    %v892 = vmul.f32 %v842, %v842
    %v893 = vmul.f32 %v845, %v845
    %v894 = vmul.f32 %v850, %v850
    %v895 = vmul.f32 %v853, %v853
    %v896 = vmul.f32 %v858, %v858
    %v897 = vmul.f32 %v861, %v861
    %898 = vadd.xlane.f32.xlu0 %v890
    %v899 = vpop.xlane.xlu0 %898
    %900 = vadd.xlane.f32.xlu0 %v891
    %v901 = vpop.xlane.xlu0 %900
    %902 = vadd.xlane.f32.xlu0 %v892
    %v903 = vpop.xlane.xlu0 %902
    %904 = vadd.xlane.f32.xlu0 %v893
    %v905 = vpop.xlane.xlu0 %904
    %906 = vadd.xlane.f32.xlu0 %v894
    %v907 = vpop.xlane.xlu0 %906
    %908 = vadd.xlane.f32.xlu0 %v895
    %v909 = vpop.xlane.xlu0 %908
    %910 = vadd.xlane.f32.xlu0 %v896
    %v911 = vpop.xlane.xlu0 %910
    %912 = vadd.xlane.f32.xlu0 %v897
    %v913 = vpop.xlane.xlu0 %912
    %v914 = vmul.f32 %v899, 0.03125
    %v915 = vmul.f32 %v901, 0.03125
    %v916 = vmul.f32 %v903, 0.03125
    %v917 = vmul.f32 %v905, 0.03125
    %v918 = vmul.f32 %v907, 0.03125
    %v919 = vmul.f32 %v909, 0.03125
    %v920 = vmul.f32 %v911, 0.03125
    %v921 = vmul.f32 %v913, 0.03125
    %v922 = vmul.f32 %v882, %v882
    %v923 = vmul.f32 %v883, %v883
    %v924 = vmul.f32 %v884, %v884
    %v925 = vmul.f32 %v885, %v885
    %v926 = vmul.f32 %v886, %v886
    %v927 = vmul.f32 %v887, %v887
    %v928 = vmul.f32 %v888, %v888
    %v929 = vmul.f32 %v889, %v889
    %v930 = vsub.f32 %v914, %v922
    %v931 = vsub.f32 %v915, %v923
    %v932 = vsub.f32 %v916, %v924
    %v933 = vsub.f32 %v917, %v925
    %v934 = vsub.f32 %v918, %v926
    %v935 = vsub.f32 %v919, %v927
    %v936 = vsub.f32 %v920, %v928
    %v937 = vsub.f32 %v921, %v929
    %v938 = vsub.f32 %v834, %v882
    %v939 = vsub.f32 %v837, %v883
    %v940 = vsub.f32 %v842, %v884
    %v941 = vsub.f32 %v845, %v885
    %v942 = vsub.f32 %v850, %v886
    %v943 = vsub.f32 %v853, %v887
    %v944 = vsub.f32 %v858, %v888
    %v945 = vsub.f32 %v861, %v889
    %v946 = vadd.f32 %v930, 1e-05
    %v947 = vadd.f32 %v931, 1e-05
    %v948 = vadd.f32 %v932, 1e-05
    %v949 = vadd.f32 %v933, 1e-05
    %v950 = vadd.f32 %v934, 1e-05
    %v951 = vadd.f32 %v935, 1e-05
    %v952 = vadd.f32 %v936, 1e-05
    %v953 = vadd.f32 %v937, 1e-05
    %v954 = vrsqrt.pop %v946
    %v955 = vrsqrt.pop %v947
    %v956 = vrsqrt.pop %v948
    %v957 = vrsqrt.pop %v949
    %v958 = vrsqrt.pop %v950
    %v959 = vrsqrt.pop %v951
    %v960 = vrsqrt.pop %v952
    %v961 = vrsqrt.pop %v953
    %v962 = vmul.f32 %v938, %v954
    %v963 = vmul.f32 %v939, %v955
    %v964 = vmul.f32 %v940, %v956
    %v965 = vmul.f32 %v941, %v957
    %v966 = vmul.f32 %v942, %v958
    %v967 = vmul.f32 %v943, %v959
    %v968 = vmul.f32 %v944, %v960
    %v969 = vmul.f32 %v945, %v961
    %v971 = vlaneseq
    %v972 = vshrl.u32 %v971, 7
    %v973 = vsub.s32 0, %v972
    %v974 = vrot.slane %v864, %v973
    %v976 = vmul.f32 %v962, %v974
    %v977 = vmul.f32 %v963, %v974
    %v978 = vmul.f32 %v964, %v974
    %v979 = vmul.f32 %v965, %v974
    %v980 = vmul.f32 %v966, %v974
    %v981 = vmul.f32 %v967, %v974
    %v982 = vmul.f32 %v968, %v974
    %v983 = vmul.f32 %v969, %v974
    %v985 = vlaneseq
    %v986 = vshrl.u32 %v985, 7
    %v987 = vsub.s32 0, %v986
    %v988 = vrot.slane %v865, %v987
    %v990 = vadd.f32 %v976, %v988
    %v991 = vadd.f32 %v977, %v988
    %v992 = vadd.f32 %v978, %v988
    %v993 = vadd.f32 %v979, %v988
    %v994 = vadd.f32 %v980, %v988
    %v995 = vadd.f32 %v981, %v988
    %v996 = vadd.f32 %v982, %v988
    %v997 = vadd.f32 %v983, %v988
    %v998 = vmax.f32 %v990, 0.0
    %v999 = vmax.f32 %v991, 0.0
    %v1000 = vmax.f32 %v992, 0.0
    %v1001 = vmax.f32 %v993, 0.0
    %v1002 = vmax.f32 %v994, 0.0
    %v1003 = vmax.f32 %v995, 0.0
    %v1004 = vmax.f32 %v996, 0.0
    %v1005 = vmax.f32 %v997, 0.0
    %v1006 = vadd.f32 %v998, %v434
    %v1007 = vadd.f32 %v999, %v435
    %v1008 = vadd.f32 %v1000, %v436
    %v1009 = vadd.f32 %v1001, %v437
    %v1010 = vadd.f32 %v1002, %v438
    %v1011 = vadd.f32 %v1003, %v439
    %v1012 = vadd.f32 %v1004, %v440
    %v1013 = vadd.f32 %v1005, %v441
    %v1014 = vmax.f32 %v1006, 0.0
    %v1015 = vmax.f32 %v1007, 0.0
    %v1016 = vmax.f32 %v1008, 0.0
    %v1017 = vmax.f32 %v1009, 0.0
    %v1018 = vmax.f32 %v1010, 0.0
    %v1019 = vmax.f32 %v1011, 0.0
    %v1020 = vmax.f32 %v1012, 0.0
    %v1021 = vmax.f32 %v1013, 0.0
    %v1022 = vpack.c.bf16 %v1015, %v1014
    %v1023 = vpack.c.bf16 %v1017, %v1016
    %v1024 = vpack.c.bf16 %v1019, %v1018
    %v1025 = vpack.c.bf16 %v1021, %v1020
    %s1026 = scalar_lea.vmem [#allocation8], 64
    %v1027 = vld [vmem:[%s1026] sm:$0xf]
    %v1028 = vld [vmem:[%s1026 + $0x4] sm:$0xf]
    %v1029 = vld [vmem:[%s1026 + $0x8] sm:$0xf]
    %v1030 = vld [vmem:[%s1026 + $0xc] sm:$0xf]
    %v1031 = vld [vmem:[%s1026 + $0x10] sm:$0xf]
    %v1032 = vld [vmem:[%s1026 + $0x14] sm:$0xf]
    %v1033 = vld [vmem:[%s1026 + $0x18] sm:$0xf]
    %v1034 = vld [vmem:[%s1026 + $0x1c] sm:$0xf]
    %v1035 = vld [vmem:[%s1026 + $0x20] sm:$0xf]
    %v1036 = vld [vmem:[%s1026 + $0x24] sm:$0xf]
    %v1037 = vld [vmem:[%s1026 + $0x28] sm:$0xf]
    %v1038 = vld [vmem:[%s1026 + $0x2c] sm:$0xf]
    %v1039 = vld [vmem:[%s1026 + $0x30] sm:$0xf]
    %v1040 = vld [vmem:[%s1026 + $0x34] sm:$0xf]
    %v1041 = vld [vmem:[%s1026 + $0x38] sm:$0xf]
    %v1042 = vld [vmem:[%s1026 + $0x3c] sm:$0xf]
    %s1043 = scalar_lea.vmem %s6, 1
    %v1044 = vld [vmem:[%s1043] sm:$0x1]
    %v1046 = vlaneseq
    %v1047 = vshrl.u32 %v1046, 7
    %v1048 = vsub.s32 0, %v1047
    %v1049 = vrot.slane %v1044, %v1048
    %v1067 = vunpack.c.l.b16 %v1027
    %v1068 = vunpack.c.l.b16 %v1028
    %v1069 = vunpack.c.l.b16 %v1029
    %v1070 = vunpack.c.l.b16 %v1030
    %v1071 = vunpack.c.l.b16 %v1031
    %v1072 = vunpack.c.l.b16 %v1032
    %v1073 = vunpack.c.l.b16 %v1033
    %v1074 = vunpack.c.l.b16 %v1034
    %v1075 = vunpack.c.l.b16 %v1035
    %v1076 = vunpack.c.l.b16 %v1036
    %v1077 = vunpack.c.l.b16 %v1037
    %v1078 = vunpack.c.l.b16 %v1038
    %v1079 = vunpack.c.l.b16 %v1039
    %v1080 = vunpack.c.l.b16 %v1040
    %v1081 = vunpack.c.l.b16 %v1041
    %v1082 = vunpack.c.l.b16 %v1042
    %v1083 = vpack.c.b16 %v1068, %v1067
    %v1084 = vpack.c.b16 %v1070, %v1069
    %v1085 = vpack.c.b16 %v1072, %v1071
    %v1086 = vpack.c.b16 %v1074, %v1073
    %v1087 = vpack.c.b16 %v1076, %v1075
    %v1088 = vpack.c.b16 %v1078, %v1077
    %v1089 = vpack.c.b16 %v1080, %v1079
    %v1090 = vpack.c.b16 %v1082, %v1081
    %1099 = vmatprep.subr.bf16.mxu0 0
    %1100 = vmatpush1.bf16.msra.mxu0 %v1083
    %1101 = vmatprep.subr.bf16.mxu0 0
    %1102 = vmatpush1.bf16.msra.mxu0 %v1084
    %1103 = vmatprep.subr.bf16.mxu0 0
    %1104 = vmatpush1.bf16.msra.mxu0 %v1085
    %1105 = vmatprep.subr.bf16.mxu0 0
    %1106 = vmatpush1.bf16.msra.mxu0 %v1086
    %1107 = vmatprep.subr.bf16.mxu0 0
    %1108 = vmatpush1.bf16.msra.mxu0 %v1087
    %1109 = vmatprep.subr.bf16.mxu0 0
    %1110 = vmatpush1.bf16.msra.mxu0 %v1088
    %1111 = vmatprep.subr.bf16.mxu0 0
    %1112 = vmatpush1.bf16.msra.mxu0 %v1089
    %1113 = vmatprep.subr.bf16.mxu0 0
    %1114 = vmatpush1.bf16.msra.mxu0 %v1090
    %1115 = vmatprep.subr.bf16.mxu0 0
    %1116 = vmatpush1.bf16.msra.mxu0 0
    %1117 = vmatprep.subr.bf16.mxu0 0
    %1118 = vmatpush1.bf16.msra.mxu0 0
    %1119 = vmatprep.subr.bf16.mxu0 0
    %1120 = vmatpush1.bf16.msra.mxu0 0
    %1121 = vmatprep.subr.bf16.mxu0 0
    %1122 = vmatpush1.bf16.msra.mxu0 0
    %1123 = vmatprep.subr.bf16.mxu0 0
    %1124 = vmatpush1.bf16.msra.mxu0 0
    %1125 = vmatprep.subr.bf16.mxu0 0
    %1126 = vmatpush1.bf16.msra.mxu0 0
    %1127 = vmatprep.subr.bf16.mxu0 0
    %1128 = vmatpush1.bf16.msra.mxu0 0
    %1129 = vmatprep.subr.bf16.mxu0 0
    %1130 = vmatpush1.bf16.msra.mxu0 0
    %1131 = vmatprep.mubr.bf16.mxu0 0
    %1132 = vmatmul.mubr.bf16.gmra.mrb[0].mxu0 %v1022
    %v1133 = vpop.f32.mrb[0].mxu0
    %v1134 = vadd.f32 %v1049, %v1133
    %v1135 = vpop.f32.mrb[0].mxu0
    %v1136 = vpop.f32.mrb[0].mxu0
    %v1137 = vadd.f32 %v1049, %v1136
    %v1138 = vpop.f32.mrb[0].mxu0
    %1139 = vmatprep.mubr.bf16.mxu0 0
    %1140 = vmatmul.mubr.bf16.gmra.mrb[0].mxu0 %v1023
    %v1141 = vpop.f32.mrb[0].mxu0
    %v1142 = vadd.f32 %v1049, %v1141
    %v1143 = vpop.f32.mrb[0].mxu0
    %v1144 = vpop.f32.mrb[0].mxu0
    %v1145 = vadd.f32 %v1049, %v1144
    %v1146 = vpop.f32.mrb[0].mxu0
    %1147 = vmatprep.mubr.bf16.mxu0 0
    %1148 = vmatmul.mubr.bf16.gmra.mrb[0].mxu0 %v1024
    %v1149 = vpop.f32.mrb[0].mxu0
    %v1150 = vadd.f32 %v1049, %v1149
    %v1151 = vpop.f32.mrb[0].mxu0
    %v1152 = vpop.f32.mrb[0].mxu0
    %v1153 = vadd.f32 %v1049, %v1152
    %v1154 = vpop.f32.mrb[0].mxu0
    %1155 = vmatprep.mubr.bf16.mxu0 0
    %1156 = vmatmul.mubr.bf16.gmra.mrb[0].mxu0 %v1025
    %v1157 = vpop.f32.mrb[0].mxu0
    %v1158 = vadd.f32 %v1049, %v1157
    %v1159 = vpop.f32.mrb[0].mxu0
    %v1160 = vpop.f32.mrb[0].mxu0
    %v1161 = vadd.f32 %v1049, %v1160
    %v1162 = vpop.f32.mrb[0].mxu0
    %1163 = vdwg.mxu0
    %s1164 = scalar_lea.vmem %s7, 1
    %v1165 = vld [vmem:[%s1164] sm:$0x1]
    %s1166 = scalar_lea.vmem %s8, 1
    %v1167 = vld [vmem:[%s1166] sm:$0x1]
    %1168 = vadd.xlane.f32.xlu0 %v1134
    %v1169 = vpop.xlane.xlu0 %1168
    %1170 = vadd.xlane.f32.xlu0 %v1137
    %v1171 = vpop.xlane.xlu0 %1170
    %1172 = vadd.xlane.f32.xlu0 %v1142
    %v1173 = vpop.xlane.xlu0 %1172
    %1174 = vadd.xlane.f32.xlu0 %v1145
    %v1175 = vpop.xlane.xlu0 %1174
    %1176 = vadd.xlane.f32.xlu0 %v1150
    %v1177 = vpop.xlane.xlu0 %1176
    %1178 = vadd.xlane.f32.xlu0 %v1153
    %v1179 = vpop.xlane.xlu0 %1178
    %1180 = vadd.xlane.f32.xlu0 %v1158
    %v1181 = vpop.xlane.xlu0 %1180
    %1182 = vadd.xlane.f32.xlu0 %v1161
    %v1183 = vpop.xlane.xlu0 %1182
    %v1184 = vmul.f32 %v1169, 0.03125
    %v1185 = vmul.f32 %v1171, 0.03125
    %v1186 = vmul.f32 %v1173, 0.03125
    %v1187 = vmul.f32 %v1175, 0.03125
    %v1188 = vmul.f32 %v1177, 0.03125
    %v1189 = vmul.f32 %v1179, 0.03125
    %v1190 = vmul.f32 %v1181, 0.03125
    %v1191 = vmul.f32 %v1183, 0.03125
    %v1192 = vmul.f32 %v1134, %v1134
    %v1193 = vmul.f32 %v1137, %v1137
    %v1194 = vmul.f32 %v1142, %v1142
    %v1195 = vmul.f32 %v1145, %v1145
    %v1196 = vmul.f32 %v1150, %v1150
    %v1197 = vmul.f32 %v1153, %v1153
    %v1198 = vmul.f32 %v1158, %v1158
    %v1199 = vmul.f32 %v1161, %v1161
    %1200 = vadd.xlane.f32.xlu0 %v1192
    %v1201 = vpop.xlane.xlu0 %1200
    %1202 = vadd.xlane.f32.xlu0 %v1193
    %v1203 = vpop.xlane.xlu0 %1202
    %1204 = vadd.xlane.f32.xlu0 %v1194
    %v1205 = vpop.xlane.xlu0 %1204
    %1206 = vadd.xlane.f32.xlu0 %v1195
    %v1207 = vpop.xlane.xlu0 %1206
    %1208 = vadd.xlane.f32.xlu0 %v1196
    %v1209 = vpop.xlane.xlu0 %1208
    %1210 = vadd.xlane.f32.xlu0 %v1197
    %v1211 = vpop.xlane.xlu0 %1210
    %1212 = vadd.xlane.f32.xlu0 %v1198
    %v1213 = vpop.xlane.xlu0 %1212
    %1214 = vadd.xlane.f32.xlu0 %v1199
    %v1215 = vpop.xlane.xlu0 %1214
    %v1216 = vmul.f32 %v1201, 0.03125
    %v1217 = vmul.f32 %v1203, 0.03125
    %v1218 = vmul.f32 %v1205, 0.03125
    %v1219 = vmul.f32 %v1207, 0.03125
    %v1220 = vmul.f32 %v1209, 0.03125
    %v1221 = vmul.f32 %v1211, 0.03125
    %v1222 = vmul.f32 %v1213, 0.03125
    %v1223 = vmul.f32 %v1215, 0.03125
    %v1224 = vmul.f32 %v1184, %v1184
    %v1225 = vmul.f32 %v1185, %v1185
    %v1226 = vmul.f32 %v1186, %v1186
    %v1227 = vmul.f32 %v1187, %v1187
    %v1228 = vmul.f32 %v1188, %v1188
    %v1229 = vmul.f32 %v1189, %v1189
    %v1230 = vmul.f32 %v1190, %v1190
    %v1231 = vmul.f32 %v1191, %v1191
    %v1232 = vsub.f32 %v1216, %v1224
    %v1233 = vsub.f32 %v1217, %v1225
    %v1234 = vsub.f32 %v1218, %v1226
    %v1235 = vsub.f32 %v1219, %v1227
    %v1236 = vsub.f32 %v1220, %v1228
    %v1237 = vsub.f32 %v1221, %v1229
    %v1238 = vsub.f32 %v1222, %v1230
    %v1239 = vsub.f32 %v1223, %v1231
    %v1240 = vsub.f32 %v1134, %v1184
    %v1241 = vsub.f32 %v1137, %v1185
    %v1242 = vsub.f32 %v1142, %v1186
    %v1243 = vsub.f32 %v1145, %v1187
    %v1244 = vsub.f32 %v1150, %v1188
    %v1245 = vsub.f32 %v1153, %v1189
    %v1246 = vsub.f32 %v1158, %v1190
    %v1247 = vsub.f32 %v1161, %v1191
    %v1248 = vadd.f32 %v1232, 1e-05
    %v1249 = vadd.f32 %v1233, 1e-05
    %v1250 = vadd.f32 %v1234, 1e-05
    %v1251 = vadd.f32 %v1235, 1e-05
    %v1252 = vadd.f32 %v1236, 1e-05
    %v1253 = vadd.f32 %v1237, 1e-05
    %v1254 = vadd.f32 %v1238, 1e-05
    %v1255 = vadd.f32 %v1239, 1e-05
    %v1256 = vrsqrt.pop %v1248
    %v1257 = vrsqrt.pop %v1249
    %v1258 = vrsqrt.pop %v1250
    %v1259 = vrsqrt.pop %v1251
    %v1260 = vrsqrt.pop %v1252
    %v1261 = vrsqrt.pop %v1253
    %v1262 = vrsqrt.pop %v1254
    %v1263 = vrsqrt.pop %v1255
    %v1264 = vmul.f32 %v1240, %v1256
    %v1265 = vmul.f32 %v1241, %v1257
    %v1266 = vmul.f32 %v1242, %v1258
    %v1267 = vmul.f32 %v1243, %v1259
    %v1268 = vmul.f32 %v1244, %v1260
    %v1269 = vmul.f32 %v1245, %v1261
    %v1270 = vmul.f32 %v1246, %v1262
    %v1271 = vmul.f32 %v1247, %v1263
    %v1273 = vlaneseq
    %v1274 = vshrl.u32 %v1273, 7
    %v1275 = vsub.s32 0, %v1274
    %v1276 = vrot.slane %v1165, %v1275
    %v1278 = vmul.f32 %v1264, %v1276
    %v1279 = vmul.f32 %v1265, %v1276
    %v1280 = vmul.f32 %v1266, %v1276
    %v1281 = vmul.f32 %v1267, %v1276
    %v1282 = vmul.f32 %v1268, %v1276
    %v1283 = vmul.f32 %v1269, %v1276
    %v1284 = vmul.f32 %v1270, %v1276
    %v1285 = vmul.f32 %v1271, %v1276
    %v1287 = vlaneseq
    %v1288 = vshrl.u32 %v1287, 7
    %v1289 = vsub.s32 0, %v1288
    %v1290 = vrot.slane %v1167, %v1289
    %v1292 = vadd.f32 %v1278, %v1290
    %v1293 = vadd.f32 %v1279, %v1290
    %v1294 = vadd.f32 %v1280, %v1290
    %v1295 = vadd.f32 %v1281, %v1290
    %v1296 = vadd.f32 %v1282, %v1290
    %v1297 = vadd.f32 %v1283, %v1290
    %v1298 = vadd.f32 %v1284, %v1290
    %v1299 = vadd.f32 %v1285, %v1290
    %v1300 = vmax.f32 %v1292, 0.0
    %v1301 = vmax.f32 %v1293, 0.0
    %v1302 = vmax.f32 %v1294, 0.0
    %v1303 = vmax.f32 %v1295, 0.0
    %v1304 = vmax.f32 %v1296, 0.0
    %v1305 = vmax.f32 %v1297, 0.0
    %v1306 = vmax.f32 %v1298, 0.0
    %v1307 = vmax.f32 %v1299, 0.0
    %v1308 = vpack.c.bf16 %v1301, %v1300
    %v1309 = vpack.c.bf16 %v1303, %v1302
    %v1310 = vpack.c.bf16 %v1305, %v1304
    %v1311 = vpack.c.bf16 %v1307, %v1306
    %s1312 = scalar_lea.vmem [#allocation10], 64
    %v1313 = vld [vmem:[%s1312] sm:$0xf]
    %v1314 = vld [vmem:[%s1312 + $0x4] sm:$0xf]
    %v1315 = vld [vmem:[%s1312 + $0x8] sm:$0xf]
    %v1316 = vld [vmem:[%s1312 + $0xc] sm:$0xf]
    %v1317 = vld [vmem:[%s1312 + $0x10] sm:$0xf]
    %v1318 = vld [vmem:[%s1312 + $0x14] sm:$0xf]
    %v1319 = vld [vmem:[%s1312 + $0x18] sm:$0xf]
    %v1320 = vld [vmem:[%s1312 + $0x1c] sm:$0xf]
    %v1321 = vld [vmem:[%s1312 + $0x20] sm:$0xf]
    %v1322 = vld [vmem:[%s1312 + $0x24] sm:$0xf]
    %v1323 = vld [vmem:[%s1312 + $0x28] sm:$0xf]
    %v1324 = vld [vmem:[%s1312 + $0x2c] sm:$0xf]
    %v1325 = vld [vmem:[%s1312 + $0x30] sm:$0xf]
    %v1326 = vld [vmem:[%s1312 + $0x34] sm:$0xf]
    %v1327 = vld [vmem:[%s1312 + $0x38] sm:$0xf]
    %v1328 = vld [vmem:[%s1312 + $0x3c] sm:$0xf]
    %s1329 = scalar_lea.vmem %s10, 1
    %v1330 = vld [vmem:[%s1329] sm:$0x1]
    %v1332 = vlaneseq
    %v1333 = vshrl.u32 %v1332, 7
    %v1334 = vsub.s32 0, %v1333
    %v1335 = vrot.slane %v1330, %v1334
    %v1353 = vunpack.c.l.b16 %v1313
    %v1354 = vunpack.c.l.b16 %v1314
    %v1355 = vunpack.c.l.b16 %v1315
    %v1356 = vunpack.c.l.b16 %v1316
    %v1357 = vunpack.c.l.b16 %v1317
    %v1358 = vunpack.c.l.b16 %v1318
    %v1359 = vunpack.c.l.b16 %v1319
    %v1360 = vunpack.c.l.b16 %v1320
    %v1361 = vunpack.c.l.b16 %v1321
    %v1362 = vunpack.c.l.b16 %v1322
    %v1363 = vunpack.c.l.b16 %v1323
    %v1364 = vunpack.c.l.b16 %v1324
    %v1365 = vunpack.c.l.b16 %v1325
    %v1366 = vunpack.c.l.b16 %v1326
    %v1367 = vunpack.c.l.b16 %v1327
    %v1368 = vunpack.c.l.b16 %v1328
    %v1369 = vpack.c.b16 %v1354, %v1353
    %v1370 = vpack.c.b16 %v1356, %v1355
    %v1371 = vpack.c.b16 %v1358, %v1357
    %v1372 = vpack.c.b16 %v1360, %v1359
    %v1373 = vpack.c.b16 %v1362, %v1361
    %v1374 = vpack.c.b16 %v1364, %v1363
    %v1375 = vpack.c.b16 %v1366, %v1365
    %v1376 = vpack.c.b16 %v1368, %v1367
    %1385 = vmatprep.subr.bf16.mxu0 0
    %1386 = vmatpush1.bf16.msra.mxu0 %v1369
    %1387 = vmatprep.subr.bf16.mxu0 0
    %1388 = vmatpush1.bf16.msra.mxu0 %v1370
    %1389 = vmatprep.subr.bf16.mxu0 0
    %1390 = vmatpush1.bf16.msra.mxu0 %v1371
    %1391 = vmatprep.subr.bf16.mxu0 0
    %1392 = vmatpush1.bf16.msra.mxu0 %v1372
    %1393 = vmatprep.subr.bf16.mxu0 0
    %1394 = vmatpush1.bf16.msra.mxu0 %v1373
    %1395 = vmatprep.subr.bf16.mxu0 0
    %1396 = vmatpush1.bf16.msra.mxu0 %v1374
    %1397 = vmatprep.subr.bf16.mxu0 0
    %1398 = vmatpush1.bf16.msra.mxu0 %v1375
    %1399 = vmatprep.subr.bf16.mxu0 0
    %1400 = vmatpush1.bf16.msra.mxu0 %v1376
    %1401 = vmatprep.subr.bf16.mxu0 0
    %1402 = vmatpush1.bf16.msra.mxu0 0
    %1403 = vmatprep.subr.bf16.mxu0 0
    %1404 = vmatpush1.bf16.msra.mxu0 0
    %1405 = vmatprep.subr.bf16.mxu0 0
    %1406 = vmatpush1.bf16.msra.mxu0 0
    %1407 = vmatprep.subr.bf16.mxu0 0
    %1408 = vmatpush1.bf16.msra.mxu0 0
    %1409 = vmatprep.subr.bf16.mxu0 0
    %1410 = vmatpush1.bf16.msra.mxu0 0
    %1411 = vmatprep.subr.bf16.mxu0 0
    %1412 = vmatpush1.bf16.msra.mxu0 0
    %1413 = vmatprep.subr.bf16.mxu0 0
    %1414 = vmatpush1.bf16.msra.mxu0 0
    %1415 = vmatprep.subr.bf16.mxu0 0
    %1416 = vmatpush1.bf16.msra.mxu0 0
    %1417 = vmatprep.mubr.bf16.mxu0 0
    %1418 = vmatmul.mubr.bf16.gmra.mrb[0].mxu0 %v1308
    %v1419 = vpop.f32.mrb[0].mxu0
    %v1420 = vadd.f32 %v1335, %v1419
    %v1421 = vpop.f32.mrb[0].mxu0
    %v1422 = vpop.f32.mrb[0].mxu0
    %v1423 = vadd.f32 %v1335, %v1422
    %v1424 = vpop.f32.mrb[0].mxu0
    %1425 = vmatprep.mubr.bf16.mxu0 0
    %1426 = vmatmul.mubr.bf16.gmra.mrb[0].mxu0 %v1309
    %v1427 = vpop.f32.mrb[0].mxu0
    %v1428 = vadd.f32 %v1335, %v1427
    %v1429 = vpop.f32.mrb[0].mxu0
    %v1430 = vpop.f32.mrb[0].mxu0
    %v1431 = vadd.f32 %v1335, %v1430
    %v1432 = vpop.f32.mrb[0].mxu0
    %1433 = vmatprep.mubr.bf16.mxu0 0
    %1434 = vmatmul.mubr.bf16.gmra.mrb[0].mxu0 %v1310
    %v1435 = vpop.f32.mrb[0].mxu0
    %v1436 = vadd.f32 %v1335, %v1435
    %v1437 = vpop.f32.mrb[0].mxu0
    %v1438 = vpop.f32.mrb[0].mxu0
    %v1439 = vadd.f32 %v1335, %v1438
    %v1440 = vpop.f32.mrb[0].mxu0
    %1441 = vmatprep.mubr.bf16.mxu0 0
    %1442 = vmatmul.mubr.bf16.gmra.mrb[0].mxu0 %v1311
    %v1443 = vpop.f32.mrb[0].mxu0
    %v1444 = vadd.f32 %v1335, %v1443
    %v1445 = vpop.f32.mrb[0].mxu0
    %v1446 = vpop.f32.mrb[0].mxu0
    %v1447 = vadd.f32 %v1335, %v1446
    %v1448 = vpop.f32.mrb[0].mxu0
    %1449 = vdwg.mxu0
    %s1450 = scalar_lea.vmem %s11, 1
    %v1451 = vld [vmem:[%s1450] sm:$0x1]
    %s1452 = scalar_lea.vmem %s12, 1
    %v1453 = vld [vmem:[%s1452] sm:$0x1]
    %1454 = vadd.xlane.f32.xlu0 %v1420
    %v1455 = vpop.xlane.xlu0 %1454
    %1456 = vadd.xlane.f32.xlu0 %v1423
    %v1457 = vpop.xlane.xlu0 %1456
    %1458 = vadd.xlane.f32.xlu0 %v1428
    %v1459 = vpop.xlane.xlu0 %1458
    %1460 = vadd.xlane.f32.xlu0 %v1431
    %v1461 = vpop.xlane.xlu0 %1460
    %1462 = vadd.xlane.f32.xlu0 %v1436
    %v1463 = vpop.xlane.xlu0 %1462
    %1464 = vadd.xlane.f32.xlu0 %v1439
    %v1465 = vpop.xlane.xlu0 %1464
    %1466 = vadd.xlane.f32.xlu0 %v1444
    %v1467 = vpop.xlane.xlu0 %1466
    %1468 = vadd.xlane.f32.xlu0 %v1447
    %v1469 = vpop.xlane.xlu0 %1468
    %v1470 = vmul.f32 %v1455, 0.03125
    %v1471 = vmul.f32 %v1457, 0.03125
    %v1472 = vmul.f32 %v1459, 0.03125
    %v1473 = vmul.f32 %v1461, 0.03125
    %v1474 = vmul.f32 %v1463, 0.03125
    %v1475 = vmul.f32 %v1465, 0.03125
    %v1476 = vmul.f32 %v1467, 0.03125
    %v1477 = vmul.f32 %v1469, 0.03125
    %v1478 = vmul.f32 %v1420, %v1420
    %v1479 = vmul.f32 %v1423, %v1423
    %v1480 = vmul.f32 %v1428, %v1428
    %v1481 = vmul.f32 %v1431, %v1431
    %v1482 = vmul.f32 %v1436, %v1436
    %v1483 = vmul.f32 %v1439, %v1439
    %v1484 = vmul.f32 %v1444, %v1444
    %v1485 = vmul.f32 %v1447, %v1447
    %1486 = vadd.xlane.f32.xlu0 %v1478
    %v1487 = vpop.xlane.xlu0 %1486
    %1488 = vadd.xlane.f32.xlu0 %v1479
    %v1489 = vpop.xlane.xlu0 %1488
    %1490 = vadd.xlane.f32.xlu0 %v1480
    %v1491 = vpop.xlane.xlu0 %1490
    %1492 = vadd.xlane.f32.xlu0 %v1481
    %v1493 = vpop.xlane.xlu0 %1492
    %1494 = vadd.xlane.f32.xlu0 %v1482
    %v1495 = vpop.xlane.xlu0 %1494
    %1496 = vadd.xlane.f32.xlu0 %v1483
    %v1497 = vpop.xlane.xlu0 %1496
    %1498 = vadd.xlane.f32.xlu0 %v1484
    %v1499 = vpop.xlane.xlu0 %1498
    %1500 = vadd.xlane.f32.xlu0 %v1485
    %v1501 = vpop.xlane.xlu0 %1500
    %v1502 = vmul.f32 %v1487, 0.03125
    %v1503 = vmul.f32 %v1489, 0.03125
    %v1504 = vmul.f32 %v1491, 0.03125
    %v1505 = vmul.f32 %v1493, 0.03125
    %v1506 = vmul.f32 %v1495, 0.03125
    %v1507 = vmul.f32 %v1497, 0.03125
    %v1508 = vmul.f32 %v1499, 0.03125
    %v1509 = vmul.f32 %v1501, 0.03125
    %v1510 = vmul.f32 %v1470, %v1470
    %v1511 = vmul.f32 %v1471, %v1471
    %v1512 = vmul.f32 %v1472, %v1472
    %v1513 = vmul.f32 %v1473, %v1473
    %v1514 = vmul.f32 %v1474, %v1474
    %v1515 = vmul.f32 %v1475, %v1475
    %v1516 = vmul.f32 %v1476, %v1476
    %v1517 = vmul.f32 %v1477, %v1477
    %v1518 = vsub.f32 %v1502, %v1510
    %v1519 = vsub.f32 %v1503, %v1511
    %v1520 = vsub.f32 %v1504, %v1512
    %v1521 = vsub.f32 %v1505, %v1513
    %v1522 = vsub.f32 %v1506, %v1514
    %v1523 = vsub.f32 %v1507, %v1515
    %v1524 = vsub.f32 %v1508, %v1516
    %v1525 = vsub.f32 %v1509, %v1517
    %v1526 = vsub.f32 %v1420, %v1470
    %v1527 = vsub.f32 %v1423, %v1471
    %v1528 = vsub.f32 %v1428, %v1472
    %v1529 = vsub.f32 %v1431, %v1473
    %v1530 = vsub.f32 %v1436, %v1474
    %v1531 = vsub.f32 %v1439, %v1475
    %v1532 = vsub.f32 %v1444, %v1476
    %v1533 = vsub.f32 %v1447, %v1477
    %v1534 = vadd.f32 %v1518, 1e-05
    %v1535 = vadd.f32 %v1519, 1e-05
    %v1536 = vadd.f32 %v1520, 1e-05
    %v1537 = vadd.f32 %v1521, 1e-05
    %v1538 = vadd.f32 %v1522, 1e-05
    %v1539 = vadd.f32 %v1523, 1e-05
    %v1540 = vadd.f32 %v1524, 1e-05
    %v1541 = vadd.f32 %v1525, 1e-05
    %v1542 = vrsqrt.pop %v1534
    %v1543 = vrsqrt.pop %v1535
    %v1544 = vrsqrt.pop %v1536
    %v1545 = vrsqrt.pop %v1537
    %v1546 = vrsqrt.pop %v1538
    %v1547 = vrsqrt.pop %v1539
    %v1548 = vrsqrt.pop %v1540
    %v1549 = vrsqrt.pop %v1541
    %v1550 = vmul.f32 %v1526, %v1542
    %v1551 = vmul.f32 %v1527, %v1543
    %v1552 = vmul.f32 %v1528, %v1544
    %v1553 = vmul.f32 %v1529, %v1545
    %v1554 = vmul.f32 %v1530, %v1546
    %v1555 = vmul.f32 %v1531, %v1547
    %v1556 = vmul.f32 %v1532, %v1548
    %v1557 = vmul.f32 %v1533, %v1549
    %v1559 = vlaneseq
    %v1560 = vshrl.u32 %v1559, 7
    %v1561 = vsub.s32 0, %v1560
    %v1562 = vrot.slane %v1451, %v1561
    %v1564 = vmul.f32 %v1550, %v1562
    %v1565 = vmul.f32 %v1551, %v1562
    %v1566 = vmul.f32 %v1552, %v1562
    %v1567 = vmul.f32 %v1553, %v1562
    %v1568 = vmul.f32 %v1554, %v1562
    %v1569 = vmul.f32 %v1555, %v1562
    %v1570 = vmul.f32 %v1556, %v1562
    %v1571 = vmul.f32 %v1557, %v1562
    %v1573 = vlaneseq
    %v1574 = vshrl.u32 %v1573, 7
    %v1575 = vsub.s32 0, %v1574
    %v1576 = vrot.slane %v1453, %v1575
    %v1578 = vadd.f32 %v1564, %v1576
    %v1579 = vadd.f32 %v1565, %v1576
    %v1580 = vadd.f32 %v1566, %v1576
    %v1581 = vadd.f32 %v1567, %v1576
    %v1582 = vadd.f32 %v1568, %v1576
    %v1583 = vadd.f32 %v1569, %v1576
    %v1584 = vadd.f32 %v1570, %v1576
    %v1585 = vadd.f32 %v1571, %v1576
    %v1586 = vmax.f32 %v1578, 0.0
    %v1587 = vmax.f32 %v1579, 0.0
    %v1588 = vmax.f32 %v1580, 0.0
    %v1589 = vmax.f32 %v1581, 0.0
    %v1590 = vmax.f32 %v1582, 0.0
    %v1591 = vmax.f32 %v1583, 0.0
    %v1592 = vmax.f32 %v1584, 0.0
    %v1593 = vmax.f32 %v1585, 0.0
    %v1594 = vadd.f32 %v1586, %v1014
    %v1595 = vadd.f32 %v1587, %v1015
    %v1596 = vadd.f32 %v1588, %v1016
    %v1597 = vadd.f32 %v1589, %v1017
    %v1598 = vadd.f32 %v1590, %v1018
    %v1599 = vadd.f32 %v1591, %v1019
    %v1600 = vadd.f32 %v1592, %v1020
    %v1601 = vadd.f32 %v1593, %v1021
    %v1602 = vmax.f32 %v1594, 0.0
    %v1603 = vmax.f32 %v1595, 0.0
    %v1604 = vmax.f32 %v1596, 0.0
    %v1605 = vmax.f32 %v1597, 0.0
    %v1606 = vmax.f32 %v1598, 0.0
    %v1607 = vmax.f32 %v1599, 0.0
    %v1608 = vmax.f32 %v1600, 0.0
    %v1609 = vmax.f32 %v1601, 0.0
    %v1610 = vpack.c.bf16 %v1603, %v1602
    %v1611 = vpack.c.bf16 %v1605, %v1604
    %v1612 = vpack.c.bf16 %v1607, %v1606
    %v1613 = vpack.c.bf16 %v1609, %v1608
    %v1614 = vld [vmem:[#allocation11] sm:$0xf]
    %v1615 = vld [vmem:[#allocation11 + $0x4] sm:$0xf]
    %v1616 = vld [vmem:[#allocation11 + $0x8] sm:$0xf]
    %v1617 = vld [vmem:[#allocation11 + $0xc] sm:$0xf]
    %v1618 = vld [vmem:[#allocation11 + $0x10] sm:$0xf]
    %v1619 = vld [vmem:[#allocation11 + $0x14] sm:$0xf]
    %v1620 = vld [vmem:[#allocation11 + $0x18] sm:$0xf]
    %v1621 = vld [vmem:[#allocation11 + $0x1c] sm:$0xf]
    %v1622 = vld [vmem:[#allocation11 + $0x20] sm:$0xf]
    %v1623 = vld [vmem:[#allocation11 + $0x24] sm:$0xf]
    %v1624 = vld [vmem:[#allocation11 + $0x28] sm:$0xf]
    %v1625 = vld [vmem:[#allocation11 + $0x2c] sm:$0xf]
    %v1626 = vld [vmem:[#allocation11 + $0x30] sm:$0xf]
    %v1627 = vld [vmem:[#allocation11 + $0x34] sm:$0xf]
    %v1628 = vld [vmem:[#allocation11 + $0x38] sm:$0xf]
    %v1629 = vld [vmem:[#allocation11 + $0x3c] sm:$0xf]
    %v1630 = vld [vmem:[%s14] sm:$0x1]
    %v1632 = vlaneseq
    %v1633 = vshrl.u32 %v1632, 7
    %v1634 = vsub.s32 0, %v1633
    %v1635 = vrot.slane %v1630, %v1634
    %v1653 = vunpack.c.l.b16 %v1614
    %v1654 = vunpack.c.l.b16 %v1615
    %v1655 = vunpack.c.l.b16 %v1616
    %v1656 = vunpack.c.l.b16 %v1617
    %v1657 = vunpack.c.l.b16 %v1618
    %v1658 = vunpack.c.l.b16 %v1619
    %v1659 = vunpack.c.l.b16 %v1620
    %v1660 = vunpack.c.l.b16 %v1621
    %v1661 = vunpack.c.l.b16 %v1622
    %v1662 = vunpack.c.l.b16 %v1623
    %v1663 = vunpack.c.l.b16 %v1624
    %v1664 = vunpack.c.l.b16 %v1625
    %v1665 = vunpack.c.l.b16 %v1626
    %v1666 = vunpack.c.l.b16 %v1627
    %v1667 = vunpack.c.l.b16 %v1628
    %v1668 = vunpack.c.l.b16 %v1629
    %v1669 = vpack.c.b16 %v1654, %v1653
    %v1670 = vpack.c.b16 %v1656, %v1655
    %v1671 = vpack.c.b16 %v1658, %v1657
    %v1672 = vpack.c.b16 %v1660, %v1659
    %v1673 = vpack.c.b16 %v1662, %v1661
    %v1674 = vpack.c.b16 %v1664, %v1663
    %v1675 = vpack.c.b16 %v1666, %v1665
    %v1676 = vpack.c.b16 %v1668, %v1667
    %1685 = vmatprep.subr.bf16.mxu0 0
    %1686 = vmatpush1.bf16.msra.mxu0 %v1669
    %1687 = vmatprep.subr.bf16.mxu0 0
    %1688 = vmatpush1.bf16.msra.mxu0 %v1670
    %1689 = vmatprep.subr.bf16.mxu0 0
    %1690 = vmatpush1.bf16.msra.mxu0 %v1671
    %1691 = vmatprep.subr.bf16.mxu0 0
    %1692 = vmatpush1.bf16.msra.mxu0 %v1672
    %1693 = vmatprep.subr.bf16.mxu0 0
    %1694 = vmatpush1.bf16.msra.mxu0 %v1673
    %1695 = vmatprep.subr.bf16.mxu0 0
    %1696 = vmatpush1.bf16.msra.mxu0 %v1674
    %1697 = vmatprep.subr.bf16.mxu0 0
    %1698 = vmatpush1.bf16.msra.mxu0 %v1675
    %1699 = vmatprep.subr.bf16.mxu0 0
    %1700 = vmatpush1.bf16.msra.mxu0 %v1676
    %1701 = vmatprep.subr.bf16.mxu0 0
    %1702 = vmatpush1.bf16.msra.mxu0 0
    %1703 = vmatprep.subr.bf16.mxu0 0
    %1704 = vmatpush1.bf16.msra.mxu0 0
    %1705 = vmatprep.subr.bf16.mxu0 0
    %1706 = vmatpush1.bf16.msra.mxu0 0
    %1707 = vmatprep.subr.bf16.mxu0 0
    %1708 = vmatpush1.bf16.msra.mxu0 0
    %1709 = vmatprep.subr.bf16.mxu0 0
    %1710 = vmatpush1.bf16.msra.mxu0 0
    %1711 = vmatprep.subr.bf16.mxu0 0
    %1712 = vmatpush1.bf16.msra.mxu0 0
    %1713 = vmatprep.subr.bf16.mxu0 0
    %1714 = vmatpush1.bf16.msra.mxu0 0
    %1715 = vmatprep.subr.bf16.mxu0 0
    %1716 = vmatpush1.bf16.msra.mxu0 0
    %1717 = vmatprep.mubr.bf16.mxu0 0
    %1718 = vmatmul.mubr.bf16.gmra.mrb[0].mxu0 %v1610
    %v1719 = vpop.f32.mrb[0].mxu0
    %v1720 = vadd.f32 %v1635, %v1719
    %v1721 = vpop.f32.mrb[0].mxu0
    %v1722 = vpop.f32.mrb[0].mxu0
    %v1723 = vadd.f32 %v1635, %v1722
    %v1724 = vpop.f32.mrb[0].mxu0
    %1725 = vmatprep.mubr.bf16.mxu0 0
    %1726 = vmatmul.mubr.bf16.gmra.mrb[0].mxu0 %v1611
    %v1727 = vpop.f32.mrb[0].mxu0
    %v1728 = vadd.f32 %v1635, %v1727
    %v1729 = vpop.f32.mrb[0].mxu0
    %v1730 = vpop.f32.mrb[0].mxu0
    %v1731 = vadd.f32 %v1635, %v1730
    %v1732 = vpop.f32.mrb[0].mxu0
    %1733 = vmatprep.mubr.bf16.mxu0 0
    %1734 = vmatmul.mubr.bf16.gmra.mrb[0].mxu0 %v1612
    %v1735 = vpop.f32.mrb[0].mxu0
    %v1736 = vadd.f32 %v1635, %v1735
    %v1737 = vpop.f32.mrb[0].mxu0
    %v1738 = vpop.f32.mrb[0].mxu0
    %v1739 = vadd.f32 %v1635, %v1738
    %v1740 = vpop.f32.mrb[0].mxu0
    %1741 = vmatprep.mubr.bf16.mxu0 0
    %1742 = vmatmul.mubr.bf16.gmra.mrb[0].mxu0 %v1613
    %v1743 = vpop.f32.mrb[0].mxu0
    %v1744 = vadd.f32 %v1635, %v1743
    %v1745 = vpop.f32.mrb[0].mxu0
    %v1746 = vpop.f32.mrb[0].mxu0
    %v1747 = vadd.f32 %v1635, %v1746
    %v1748 = vpop.f32.mrb[0].mxu0
    %1749 = vdwg.mxu0
    %v1750 = vsub.f32 0.0, %v1720
    %v1751 = vsub.f32 0.0, %v1723
    %v1752 = vsub.f32 0.0, %v1728
    %v1753 = vsub.f32 0.0, %v1731
    %v1754 = vsub.f32 0.0, %v1736
    %v1755 = vsub.f32 0.0, %v1739
    %v1756 = vsub.f32 0.0, %v1744
    %v1757 = vsub.f32 0.0, %v1747
    %v1758 = vmul.f32 %v1750, 1.442695
    %v1759 = vpow.pop %v1758
    %v1760 = vmul.f32 %v1751, 1.442695
    %v1761 = vpow.pop %v1760
    %v1762 = vmul.f32 %v1752, 1.442695
    %v1763 = vpow.pop %v1762
    %v1764 = vmul.f32 %v1753, 1.442695
    %v1765 = vpow.pop %v1764
    %v1766 = vmul.f32 %v1754, 1.442695
    %v1767 = vpow.pop %v1766
    %v1768 = vmul.f32 %v1755, 1.442695
    %v1769 = vpow.pop %v1768
    %v1770 = vmul.f32 %v1756, 1.442695
    %v1771 = vpow.pop %v1770
    %v1772 = vmul.f32 %v1757, 1.442695
    %v1773 = vpow.pop %v1772
    %v1774 = vadd.f32 %v1759, 1.0
    %v1775 = vadd.f32 %v1761, 1.0
    %v1776 = vadd.f32 %v1763, 1.0
    %v1777 = vadd.f32 %v1765, 1.0
    %v1778 = vadd.f32 %v1767, 1.0
    %v1779 = vadd.f32 %v1769, 1.0
    %v1780 = vadd.f32 %v1771, 1.0
    %v1781 = vadd.f32 %v1773, 1.0
    %v1782 = vrcp.pop %v1774
    %v1783 = vmul.f32 1.0, %v1782
    %v1784 = vrcp.pop %v1775
    %v1785 = vmul.f32 1.0, %v1784
    %v1786 = vrcp.pop %v1776
    %v1787 = vmul.f32 1.0, %v1786
    %v1788 = vrcp.pop %v1777
    %v1789 = vmul.f32 1.0, %v1788
    %v1790 = vrcp.pop %v1778
    %v1791 = vmul.f32 1.0, %v1790
    %v1792 = vrcp.pop %v1779
    %v1793 = vmul.f32 1.0, %v1792
    %v1794 = vrcp.pop %v1780
    %v1795 = vmul.f32 1.0, %v1794
    %v1796 = vrcp.pop %v1781
    %v1797 = vmul.f32 1.0, %v1796
    %1798 = vst [vmem:[#allocation13] sm:$0xff] %v1783
    %1799 = vst [vmem:[#allocation13 + $0x8] sm:$0xff] %v1785
    %1800 = vst [vmem:[#allocation13 + $0x10] sm:$0xff] %v1787
    %1801 = vst [vmem:[#allocation13 + $0x18] sm:$0xff] %v1789
    %1802 = vst [vmem:[#allocation13 + $0x20] sm:$0xff] %v1791
    %1803 = vst [vmem:[#allocation13 + $0x28] sm:$0xff] %v1793
    %1804 = vst [vmem:[#allocation13 + $0x30] sm:$0xff] %v1795
    %1805 = vst [vmem:[#allocation13 + $0x38] sm:$0xff] %v1797
    // Predicated region
    $region86: #{tpu_custom_call.1} parent=1 // pred_check
      _
    $region87: #{tpu_custom_call.1} parent=1 // pred_check_branch
      %1807 = sbr.rel (0) target = $region89
    $region88: #{tpu_custom_call.1} parent=1 // pred_region
      %s1809 = ssub.s32 1024, 1024
      %1810 = vsyncadd [#allocation4], %s1809
      %s1811 = sshll.u32 [#allocation13], 4
      %s1812 = int_to_ptr.vmem [resolvable:$true] %s1811
      %1817 = dma.vmem_to_hbm [thread:$0]  %s1812, 1024, %s15, [#allocation4], 128, 128, 8
    $region89: #{tpu_custom_call.1} parent=1 // pred_fallthru
      _
    // Predicated region
    $region90: #{tpu_custom_call.1} parent=1 // pred_check
      _
    $region91: #{tpu_custom_call.1} parent=1 // pred_check_branch
      %1819 = sbr.rel (0) target = $region93
    $region92: #{tpu_custom_call.1} parent=1 // pred_region
      %1820 = dma.done [#allocation4], 1024
    $region93: #{tpu_custom_call.1} parent=1 // pred_fallthru
      _
    %1821 = vsyncpa [#allocation3], 1
    %1822 = vsyncpa [#allocation6], 1
    %1823 = vsyncpa [#allocation9], 1
    %1824 = vsyncpa [#allocation12], 1
    %1825 = vsyncpa [#allocation4], 1

</llo_original>
